<compile_context>
chip_gen: v7x
topology: tpu7x:2x2x1
jax: 0.10.0
libtpu: 0.0.40
codegen_flags: <defaults>
</compile_context>

<pallas_src>
import functools
import math

import jax
import jax.numpy as jnp
import numpy as np
from jax.experimental import pallas as pl
from jax.experimental.pallas import tpu as pltpu


def mha_kernel(q_ref, kT_ref, v_ref,
               wq_ref, bq_ref, wkT_ref, bkT_ref, wv_ref, bv_ref, wo_ref, bo_ref,
               out_ref, *, num_heads, mq, mv, batch_block, n_q, n_k, scale,
               compute_dtype, approx_recip):
    H, Bb = num_heads, batch_block
    cd = compute_dtype
    f32 = jnp.float32

    # Lane-dense per-grid-step tiles (batch folded into the last dim).
    q = q_ref[...].astype(cd)      # [Cq, Bb*Nq]
    kT = kT_ref[...].astype(cd)    # [Bb*Nk, Ck]
    v = v_ref[...].astype(cd)      # [Cv, Bb*Nk]

    # 1x1 conv == channel matmul.  Q, V projected channel-major; K projected position-major
    # (transposed) so all downstream dots are natural [M,K]x[K,N] forms.
    qp = jnp.dot(wq_ref[...].astype(cd), q, preferred_element_type=f32) + bq_ref[...]       # [H*mq, Bb*Nq]
    kpT = jnp.dot(kT, wkT_ref[...].astype(cd), preferred_element_type=f32) + bkT_ref[...]   # [Bb*Nk, H*mq]
    vp = jnp.dot(wv_ref[...].astype(cd), v, preferred_element_type=f32) + bv_ref[...]       # [H*mv, Bb*Nk]

    qp_c, kpT_c, vp_c = qp.astype(cd), kpT.astype(cd), vp.astype(cd)

    # Per-(batch, head) attention core.  Bb and H are small -> static unroll; all slices static.
    batch_cols = []
    for b in range(Bb):
        head_rows = []
        for h in range(H):
            qh = qp_c[h * mq:(h + 1) * mq, b * n_q:(b + 1) * n_q]      # [mq, Nq]
            khT = kpT_c[b * n_k:(b + 1) * n_k, h * mq:(h + 1) * mq]    # [Nk, mq]
            vh = vp_c[h * mv:(h + 1) * mv, b * n_k:(b + 1) * n_k]      # [mv, Nk]

            # Transposed scores: sT[k, i] = <K_k, Q_i> * scale.  Softmax over keys = axis 0.
            sT = jnp.dot(khT, qh, preferred_element_type=f32) * scale   # [Nk, Nq], f32
            sT = sT - jnp.max(sT, axis=0, keepdims=True)
            e = jnp.exp(sT)                                             # f32 (EUP)
            denom = jnp.sum(e, axis=0, keepdims=True)                   # [1, Nq]
            if approx_recip:
                pT = e * pl.reciprocal(denom, approx=True)              # divide -> EUP slot
            else:
                pT = e / denom                                          # exact f32 path

            # oh[c, i] = sum_k vh[c, k] * pT[k, i]  -- natural form, no transpose.
            head_rows.append(jnp.dot(vh, pT.astype(cd), preferred_element_type=f32))  # [mv, Nq]
        batch_cols.append(jnp.concatenate(head_rows, axis=0))           # [H*mv, Nq]
    oh_all = jnp.concatenate(batch_cols, axis=1)                        # [H*mv, Bb*Nq]

    # Single fused output projection (one MXU pass, contraction depth H*mv).
    out = jnp.dot(wo_ref[...].astype(cd), oh_all.astype(cd),
                  preferred_element_type=f32) + bo_ref[...]             # [Co, Bb*Nq]
    out_ref[...] = out.astype(out_ref.dtype)


def mha_forward(Q, K, V, params, *, num_heads, num_dim_mq, num_dim_mv, num_dim_o,
                scale, batch_block=None, compute_dtype=jnp.bfloat16):
    """Q, K, V: [B, C, N] float32 (NCH). Returns [B, num_dim_o, Nq]."""
    wq, bq, wk, bk, wv, bv, wo, bo = params
    B, Cq, Nq = Q.shape
    _, Ck, Nk = K.shape
    _, Cv, Nv = V.shape
    assert Nv == Nk
    H, mq, mv, Co = num_heads, num_dim_mq, num_dim_mv, num_dim_o

    if batch_block is None:
        batch_block = B
    assert B % batch_block == 0
    Bb = batch_block
    G = B // Bb

    # PyTorch channel layout is c = d*H + h (feature-major).  Permute weights so the kernel's
    # projection outputs are head-major: row/col r = h*m + d.
    perm_q = jnp.array([d * H + h for h in range(H) for d in range(mq)], dtype=jnp.int32)
    perm_v = jnp.array([d * H + h for h in range(H) for d in range(mv)], dtype=jnp.int32)
    wq_p = wq[perm_q]
    bq_p = bq[perm_q].reshape(-1, 1)                     # [H*mq, 1]
    wkT_p = wk[perm_q].T                                 # [Ck, H*mq]  (K projected transposed)
    bkT_p = bk[perm_q].reshape(1, -1)                    # [1, H*mq]
    wv_p = wv[perm_v]
    bv_p = bv[perm_v].reshape(-1, 1)                     # [H*mv, 1]
    wo_p = wo[:, perm_v]                                 # [Co, H*mv]
    bo_p = bo.reshape(-1, 1)                             # [Co, 1]

    # Fold batch into the lane (last) dim: [B, C, N] -> [G, C, Bb*N] (K position-major instead).
    q2 = Q.reshape(G, Bb, Cq, Nq).transpose(0, 2, 1, 3).reshape(G, Cq, Bb * Nq)
    kT2 = K.reshape(G, Bb, Ck, Nk).transpose(0, 1, 3, 2).reshape(G, Bb * Nk, Ck)
    v2 = V.reshape(G, Bb, Cv, Nk).transpose(0, 2, 1, 3).reshape(G, Cv, Bb * Nk)

    approx_recip = np.dtype(compute_dtype) != np.dtype(np.float32)

    kernel = functools.partial(
        mha_kernel, num_heads=H, mq=mq, mv=mv, batch_block=Bb, n_q=Nq, n_k=Nk,
        scale=scale, compute_dtype=compute_dtype, approx_recip=approx_recip)

    const2d = lambda arr: pl.BlockSpec(arr.shape, lambda g: (0, 0))

    out = pl.pallas_call(
        kernel,
        out_shape=jax.ShapeDtypeStruct((G, Co, Bb * Nq), Q.dtype),
        grid=(G,),
        in_specs=[
            pl.BlockSpec((None, Cq, Bb * Nq), lambda g: (g, 0, 0)),
            pl.BlockSpec((None, Bb * Nk, Ck), lambda g: (g, 0, 0)),
            pl.BlockSpec((None, Cv, Bb * Nk), lambda g: (g, 0, 0)),
            const2d(wq_p), const2d(bq_p),
            const2d(wkT_p), const2d(bkT_p),
            const2d(wv_p), const2d(bv_p),
            const2d(wo_p), const2d(bo_p),
        ],
        out_specs=pl.BlockSpec((None, Co, Bb * Nq), lambda g: (g, 0, 0)),
        compiler_params=pltpu.CompilerParams(dimension_semantics=("parallel",)),
    )(q2, kT2, v2, wq_p, bq_p, wkT_p, bkT_p, wv_p, bv_p, wo_p, bo_p)

    # [G, Co, Bb*Nq] -> [B, Co, Nq]  (pure layout plumbing on the host).
    return out.reshape(G, Co, Bb, Nq).transpose(0, 2, 1, 3).reshape(B, Co, Nq)


def mha_reference(Q, K, V, params, *, num_heads, num_dim_mq, num_dim_mv, scale):
    """Pure-JAX mirror of the PyTorch forward (NCH path) for validation."""
    wq, bq, wk, bk, wv, bv, wo, bo = params
    conv1x1 = lambda x, w, b: jnp.einsum('oc,bcn->bon', w, x) + b[None, :, None]
    q = conv1x1(Q, wq, bq)
    k = conv1x1(K, wk, bk)
    v = conv1x1(V, wv, bv)
    B, _, Nq = q.shape
    Nk = k.shape[2]
    H, mq, mv = num_heads, num_dim_mq, num_dim_mv
    qr = q.reshape(B, mq, H, Nq, 1)
    kr = k.reshape(B, mq, H, 1, Nk)
    x = jax.nn.softmax((qr * kr).sum(1, keepdims=True) * scale, axis=4)  # [B,1,H,Nq,Nk]
    vr = v.reshape(B, mv, H, 1, Nk)
    o = (x * vr).sum(4)                                                  # [B,mv,H,Nq]
    o = o.reshape(B, mv * H, Nq)
    return conv1x1(o, wo, bo)


if __name__ == "__main__":
    # Module hyper-parameters (NCH, rank=3 -> Conv1d 1x1 projections).
    num_dim_q = 32
    num_heads = 4
    num_dim_v = num_dim_q
    num_dim_mq = num_dim_q // num_heads   # 8
    num_dim_mv = num_dim_v // num_heads   # 8
    num_dim_o = num_dim_v                 # 32
    scale = 1.0 / math.sqrt(num_dim_q)

    B, N = 2, 16

    key = jax.random.PRNGKey(0)
    keys = jax.random.split(key, 12)

    # Deterministic synthetic parameters (Conv1d kernel_size=1 weights stored as [out, in]).
    wq = 0.1 * jax.random.normal(keys[0], (num_dim_mq * num_heads, num_dim_q), jnp.float32)
    bq = 0.1 * jax.random.normal(keys[1], (num_dim_mq * num_heads,), jnp.float32)
    wk = 0.1 * jax.random.normal(keys[2], (num_dim_mq * num_heads, num_dim_q), jnp.float32)
    bk = 0.1 * jax.random.normal(keys[3], (num_dim_mq * num_heads,), jnp.float32)
    wv = 0.1 * jax.random.normal(keys[4], (num_dim_mv * num_heads, num_dim_v), jnp.float32)
    bv = 0.1 * jax.random.normal(keys[5], (num_dim_mv * num_heads,), jnp.float32)
    wo = 0.1 * jax.random.normal(keys[6], (num_dim_o, num_dim_mv * num_heads), jnp.float32)
    bo = 0.1 * jax.random.normal(keys[7], (num_dim_o,), jnp.float32)
    params = (wq, bq, wk, bk, wv, bv, wo, bo)

    # Inputs: NCH = [batch, channels, length].
    Q = jax.random.normal(keys[8], (B, num_dim_q, N), jnp.float32)
    K = jax.random.normal(keys[9], (B, num_dim_q, N), jnp.float32)
    V = jax.random.normal(keys[10], (B, num_dim_v, N), jnp.float32)

    ref = mha_reference(Q, K, V, params,
                        num_heads=num_heads, num_dim_mq=num_dim_mq,
                        num_dim_mv=num_dim_mv, scale=scale)

    # Fast path: bf16 MXU operands, f32 accumulation, EUP approx-reciprocal softmax.
    out_bf16 = mha_forward(Q, K, V, params,
                           num_heads=num_heads, num_dim_mq=num_dim_mq,
                           num_dim_mv=num_dim_mv, num_dim_o=num_dim_o, scale=scale,
                           compute_dtype=jnp.bfloat16)
    out_bf16 = jax.block_until_ready(out_bf16)
    assert out_bf16.shape == (B, num_dim_o, N), out_bf16.shape
    assert jnp.allclose(out_bf16, ref, atol=2e-2, rtol=2e-2), \
        float(jnp.max(jnp.abs(out_bf16 - ref)))

    # Exact path: f32 operands everywhere (matches the PyTorch forward to tight tolerance).
    out_f32 = mha_forward(Q, K, V, params,
                          num_heads=num_heads, num_dim_mq=num_dim_mq,
                          num_dim_mv=num_dim_mv, num_dim_o=num_dim_o, scale=scale,
                          compute_dtype=jnp.float32)
    out_f32 = jax.block_until_ready(out_f32)
    assert out_f32.shape == (B, num_dim_o, N), out_f32.shape
    assert jnp.allclose(out_f32, ref, atol=1e-4, rtol=1e-4), \
        float(jnp.max(jnp.abs(out_f32 - ref)))

    print("KERNEL_OK")
</pallas_src>

<mosaic_0001>
module attributes {stable_mosaic.version = 11 : i64} {
  func.func @mha_kernel(%arg0: i32, %arg1: memref<1x32x32xf32, #tpu.memory_space<vmem>>, %arg2: memref<1x32x32xf32, #tpu.memory_space<vmem>>, %arg3: memref<1x32x32xf32, #tpu.memory_space<vmem>>, %arg4: memref<32x32xf32, #tpu.memory_space<vmem>>, %arg5: memref<32x1xf32, #tpu.memory_space<vmem>>, %arg6: memref<32x32xf32, #tpu.memory_space<vmem>>, %arg7: memref<1x32xf32, #tpu.memory_space<vmem>>, %arg8: memref<32x32xf32, #tpu.memory_space<vmem>>, %arg9: memref<32x1xf32, #tpu.memory_space<vmem>>, %arg10: memref<32x32xf32, #tpu.memory_space<vmem>>, %arg11: memref<32x1xf32, #tpu.memory_space<vmem>>, %arg12: memref<1x32x32xf32, #tpu.memory_space<vmem>>) attributes {dimension_semantics = [#tpu.dimension_semantics<parallel>], iteration_bounds = array<i64: 1>, scalar_prefetch = 0 : i64, scratch_operands = 0 : i64, tpu.core_type = #tpu.core_type<tc>, window_params = [{transform_indices = @transform_0, window_bounds = array<i64: 1, 32, 32>}, {transform_indices = @transform_1, window_bounds = array<i64: 1, 32, 32>}, {transform_indices = @transform_2, window_bounds = array<i64: 1, 32, 32>}, {pipeline_mode = #tpu.pipeline_mode<synchronous>, transform_indices = @transform_3, window_bounds = array<i64: 32, 32>}, {pipeline_mode = #tpu.pipeline_mode<synchronous>, transform_indices = @transform_4, window_bounds = array<i64: 32, 1>}, {pipeline_mode = #tpu.pipeline_mode<synchronous>, transform_indices = @transform_5, window_bounds = array<i64: 32, 32>}, {pipeline_mode = #tpu.pipeline_mode<synchronous>, transform_indices = @transform_6, window_bounds = array<i64: 1, 32>}, {pipeline_mode = #tpu.pipeline_mode<synchronous>, transform_indices = @transform_7, window_bounds = array<i64: 32, 32>}, {pipeline_mode = #tpu.pipeline_mode<synchronous>, transform_indices = @transform_8, window_bounds = array<i64: 32, 1>}, {pipeline_mode = #tpu.pipeline_mode<synchronous>, transform_indices = @transform_9, window_bounds = array<i64: 32, 32>}, {pipeline_mode = #tpu.pipeline_mode<synchronous>, transform_indices = @transform_10, window_bounds = array<i64: 32, 1>}, {transform_indices = @transform_11, window_bounds = array<i64: 1, 32, 32>}]} {
    %c0 = arith.constant 0 : index
    %c0_0 = arith.constant 0 : index
    %c0_1 = arith.constant 0 : index
    %0 = vector.load %arg1[%c0, %c0_0, %c0_1] : memref<1x32x32xf32, #tpu.memory_space<vmem>>, vector<1x32x32xf32>
    %1 = vector.shape_cast %0 : vector<1x32x32xf32> to vector<32x32xf32>
    %2 = arith.truncf %1 : vector<32x32xf32> to vector<32x32xbf16>
    %c0_2 = arith.constant 0 : index
    %c0_3 = arith.constant 0 : index
    %c0_4 = arith.constant 0 : index
    %3 = vector.load %arg2[%c0_2, %c0_3, %c0_4] : memref<1x32x32xf32, #tpu.memory_space<vmem>>, vector<1x32x32xf32>
    %4 = vector.shape_cast %3 : vector<1x32x32xf32> to vector<32x32xf32>
    %5 = arith.truncf %4 : vector<32x32xf32> to vector<32x32xbf16>
    %c0_5 = arith.constant 0 : index
    %c0_6 = arith.constant 0 : index
    %c0_7 = arith.constant 0 : index
    %6 = vector.load %arg3[%c0_5, %c0_6, %c0_7] : memref<1x32x32xf32, #tpu.memory_space<vmem>>, vector<1x32x32xf32>
    %7 = vector.shape_cast %6 : vector<1x32x32xf32> to vector<32x32xf32>
    %8 = arith.truncf %7 : vector<32x32xf32> to vector<32x32xbf16>
    %c0_8 = arith.constant 0 : index
    %c0_9 = arith.constant 0 : index
    %9 = vector.load %arg4[%c0_8, %c0_9] : memref<32x32xf32, #tpu.memory_space<vmem>>, vector<32x32xf32>
    %10 = arith.truncf %9 : vector<32x32xf32> to vector<32x32xbf16>
    %cst = arith.constant dense<0.000000e+00> : vector<32x32xf32>
    %11 = tpu.matmul %10, %2, %cst {dimension_numbers = #tpu.dot_dimension_numbers<[1], [0], [0], [1], [0, 0, 1, 1], [], []>} : vector<32x32xbf16>, vector<32x32xbf16>, vector<32x32xf32> -> vector<32x32xf32>
    %c0_10 = arith.constant 0 : index
    %c0_11 = arith.constant 0 : index
    %12 = vector.load %arg5[%c0_10, %c0_11] : memref<32x1xf32, #tpu.memory_space<vmem>>, vector<32x1xf32>
    %13 = vector.broadcast %12 : vector<32x1xf32> to vector<32x32xf32>
    %14 = arith.addf %11, %13 : vector<32x32xf32>
    %c0_12 = arith.constant 0 : index
    %c0_13 = arith.constant 0 : index
    %15 = vector.load %arg6[%c0_12, %c0_13] : memref<32x32xf32, #tpu.memory_space<vmem>>, vector<32x32xf32>
    %16 = arith.truncf %15 : vector<32x32xf32> to vector<32x32xbf16>
    %cst_14 = arith.constant dense<0.000000e+00> : vector<32x32xf32>
    %17 = tpu.matmul %5, %16, %cst_14 {dimension_numbers = #tpu.dot_dimension_numbers<[1], [0], [0], [1], [0, 0, 1, 1], [], []>} : vector<32x32xbf16>, vector<32x32xbf16>, vector<32x32xf32> -> vector<32x32xf32>
    %c0_15 = arith.constant 0 : index
    %c0_16 = arith.constant 0 : index
    %18 = vector.load %arg7[%c0_15, %c0_16] : memref<1x32xf32, #tpu.memory_space<vmem>>, vector<1x32xf32>
    %19 = vector.broadcast %18 : vector<1x32xf32> to vector<32x32xf32>
    %20 = arith.addf %17, %19 : vector<32x32xf32>
    %c0_17 = arith.constant 0 : index
    %c0_18 = arith.constant 0 : index
    %21 = vector.load %arg8[%c0_17, %c0_18] : memref<32x32xf32, #tpu.memory_space<vmem>>, vector<32x32xf32>
    %22 = arith.truncf %21 : vector<32x32xf32> to vector<32x32xbf16>
    %cst_19 = arith.constant dense<0.000000e+00> : vector<32x32xf32>
    %23 = tpu.matmul %22, %8, %cst_19 {dimension_numbers = #tpu.dot_dimension_numbers<[1], [0], [0], [1], [0, 0, 1, 1], [], []>} : vector<32x32xbf16>, vector<32x32xbf16>, vector<32x32xf32> -> vector<32x32xf32>
    %c0_20 = arith.constant 0 : index
    %c0_21 = arith.constant 0 : index
    %24 = vector.load %arg9[%c0_20, %c0_21] : memref<32x1xf32, #tpu.memory_space<vmem>>, vector<32x1xf32>
    %25 = vector.broadcast %24 : vector<32x1xf32> to vector<32x32xf32>
    %26 = arith.addf %23, %25 : vector<32x32xf32>
    %27 = arith.truncf %14 : vector<32x32xf32> to vector<32x32xbf16>
    %28 = arith.truncf %20 : vector<32x32xf32> to vector<32x32xbf16>
    %29 = arith.truncf %26 : vector<32x32xf32> to vector<32x32xbf16>
    %30 = vector.extract_strided_slice %27 {offsets = [0, 0], sizes = [8, 16], strides = [1, 1]} : vector<32x32xbf16> to vector<8x16xbf16>
    %31 = vector.extract_strided_slice %28 {offsets = [0, 0], sizes = [16, 8], strides = [1, 1]} : vector<32x32xbf16> to vector<16x8xbf16>
    %32 = vector.extract_strided_slice %29 {offsets = [0, 0], sizes = [8, 16], strides = [1, 1]} : vector<32x32xbf16> to vector<8x16xbf16>
    %cst_22 = arith.constant dense<0.000000e+00> : vector<16x16xf32>
    %33 = tpu.matmul %31, %30, %cst_22 {dimension_numbers = #tpu.dot_dimension_numbers<[1], [0], [0], [1], [0, 0, 1, 1], [], []>} : vector<16x8xbf16>, vector<8x16xbf16>, vector<16x16xf32> -> vector<16x16xf32>
    %cst_23 = arith.constant 0.176776692 : f32
    %34 = vector.broadcast %cst_23 : f32 to vector<16x16xf32>
    %35 = arith.mulf %33, %34 : vector<16x16xf32>
    %cst_24 = arith.constant dense<0xFF800000> : vector<16xf32>
    %36 = vector.multi_reduction <maximumf>, %35, %cst_24 [0] : vector<16x16xf32> to vector<16xf32>
    %37 = vector.shape_cast %36 : vector<16xf32> to vector<1x16xf32>
    %38 = vector.broadcast %37 : vector<1x16xf32> to vector<16x16xf32>
    %39 = arith.subf %35, %38 : vector<16x16xf32>
    %40 = math.exp %39 : vector<16x16xf32>
    %cst_25 = arith.constant dense<0.000000e+00> : vector<16xf32>
    %41 = vector.multi_reduction <add>, %40, %cst_25 [0] : vector<16x16xf32> to vector<16xf32>
    %42 = vector.shape_cast %41 : vector<16xf32> to vector<1x16xf32>
    %43 = tpu.reciprocal %42 {approx = true} : vector<1x16xf32> -> vector<1x16xf32>
    %44 = vector.broadcast %43 : vector<1x16xf32> to vector<16x16xf32>
    %45 = arith.mulf %40, %44 : vector<16x16xf32>
    %46 = arith.truncf %45 : vector<16x16xf32> to vector<16x16xbf16>
    %cst_26 = arith.constant dense<0.000000e+00> : vector<8x16xf32>
    %47 = tpu.matmul %32, %46, %cst_26 {dimension_numbers = #tpu.dot_dimension_numbers<[1], [0], [0], [1], [0, 0, 1, 1], [], []>} : vector<8x16xbf16>, vector<16x16xbf16>, vector<8x16xf32> -> vector<8x16xf32>
    %48 = vector.extract_strided_slice %27 {offsets = [8, 0], sizes = [8, 16], strides = [1, 1]} : vector<32x32xbf16> to vector<8x16xbf16>
    %49 = vector.extract_strided_slice %28 {offsets = [0, 8], sizes = [16, 8], strides = [1, 1]} : vector<32x32xbf16> to vector<16x8xbf16>
    %50 = vector.extract_strided_slice %29 {offsets = [8, 0], sizes = [8, 16], strides = [1, 1]} : vector<32x32xbf16> to vector<8x16xbf16>
    %cst_27 = arith.constant dense<0.000000e+00> : vector<16x16xf32>
    %51 = tpu.matmul %49, %48, %cst_27 {dimension_numbers = #tpu.dot_dimension_numbers<[1], [0], [0], [1], [0, 0, 1, 1], [], []>} : vector<16x8xbf16>, vector<8x16xbf16>, vector<16x16xf32> -> vector<16x16xf32>
    %cst_28 = arith.constant 0.176776692 : f32
    %52 = vector.broadcast %cst_28 : f32 to vector<16x16xf32>
    %53 = arith.mulf %51, %52 : vector<16x16xf32>
    %cst_29 = arith.constant dense<0xFF800000> : vector<16xf32>
    %54 = vector.multi_reduction <maximumf>, %53, %cst_29 [0] : vector<16x16xf32> to vector<16xf32>
    %55 = vector.shape_cast %54 : vector<16xf32> to vector<1x16xf32>
    %56 = vector.broadcast %55 : vector<1x16xf32> to vector<16x16xf32>
    %57 = arith.subf %53, %56 : vector<16x16xf32>
    %58 = math.exp %57 : vector<16x16xf32>
    %cst_30 = arith.constant dense<0.000000e+00> : vector<16xf32>
    %59 = vector.multi_reduction <add>, %58, %cst_30 [0] : vector<16x16xf32> to vector<16xf32>
    %60 = vector.shape_cast %59 : vector<16xf32> to vector<1x16xf32>
    %61 = tpu.reciprocal %60 {approx = true} : vector<1x16xf32> -> vector<1x16xf32>
    %62 = vector.broadcast %61 : vector<1x16xf32> to vector<16x16xf32>
    %63 = arith.mulf %58, %62 : vector<16x16xf32>
    %64 = arith.truncf %63 : vector<16x16xf32> to vector<16x16xbf16>
    %cst_31 = arith.constant dense<0.000000e+00> : vector<8x16xf32>
    %65 = tpu.matmul %50, %64, %cst_31 {dimension_numbers = #tpu.dot_dimension_numbers<[1], [0], [0], [1], [0, 0, 1, 1], [], []>} : vector<8x16xbf16>, vector<16x16xbf16>, vector<8x16xf32> -> vector<8x16xf32>
    %66 = vector.extract_strided_slice %27 {offsets = [16, 0], sizes = [8, 16], strides = [1, 1]} : vector<32x32xbf16> to vector<8x16xbf16>
    %67 = vector.extract_strided_slice %28 {offsets = [0, 16], sizes = [16, 8], strides = [1, 1]} : vector<32x32xbf16> to vector<16x8xbf16>
    %68 = vector.extract_strided_slice %29 {offsets = [16, 0], sizes = [8, 16], strides = [1, 1]} : vector<32x32xbf16> to vector<8x16xbf16>
    %cst_32 = arith.constant dense<0.000000e+00> : vector<16x16xf32>
    %69 = tpu.matmul %67, %66, %cst_32 {dimension_numbers = #tpu.dot_dimension_numbers<[1], [0], [0], [1], [0, 0, 1, 1], [], []>} : vector<16x8xbf16>, vector<8x16xbf16>, vector<16x16xf32> -> vector<16x16xf32>
    %cst_33 = arith.constant 0.176776692 : f32
    %70 = vector.broadcast %cst_33 : f32 to vector<16x16xf32>
    %71 = arith.mulf %69, %70 : vector<16x16xf32>
    %cst_34 = arith.constant dense<0xFF800000> : vector<16xf32>
    %72 = vector.multi_reduction <maximumf>, %71, %cst_34 [0] : vector<16x16xf32> to vector<16xf32>
    %73 = vector.shape_cast %72 : vector<16xf32> to vector<1x16xf32>
    %74 = vector.broadcast %73 : vector<1x16xf32> to vector<16x16xf32>
    %75 = arith.subf %71, %74 : vector<16x16xf32>
    %76 = math.exp %75 : vector<16x16xf32>
    %cst_35 = arith.constant dense<0.000000e+00> : vector<16xf32>
    %77 = vector.multi_reduction <add>, %76, %cst_35 [0] : vector<16x16xf32> to vector<16xf32>
    %78 = vector.shape_cast %77 : vector<16xf32> to vector<1x16xf32>
    %79 = tpu.reciprocal %78 {approx = true} : vector<1x16xf32> -> vector<1x16xf32>
    %80 = vector.broadcast %79 : vector<1x16xf32> to vector<16x16xf32>
    %81 = arith.mulf %76, %80 : vector<16x16xf32>
    %82 = arith.truncf %81 : vector<16x16xf32> to vector<16x16xbf16>
    %cst_36 = arith.constant dense<0.000000e+00> : vector<8x16xf32>
    %83 = tpu.matmul %68, %82, %cst_36 {dimension_numbers = #tpu.dot_dimension_numbers<[1], [0], [0], [1], [0, 0, 1, 1], [], []>} : vector<8x16xbf16>, vector<16x16xbf16>, vector<8x16xf32> -> vector<8x16xf32>
    %84 = vector.extract_strided_slice %27 {offsets = [24, 0], sizes = [8, 16], strides = [1, 1]} : vector<32x32xbf16> to vector<8x16xbf16>
    %85 = vector.extract_strided_slice %28 {offsets = [0, 24], sizes = [16, 8], strides = [1, 1]} : vector<32x32xbf16> to vector<16x8xbf16>
    %86 = vector.extract_strided_slice %29 {offsets = [24, 0], sizes = [8, 16], strides = [1, 1]} : vector<32x32xbf16> to vector<8x16xbf16>
    %cst_37 = arith.constant dense<0.000000e+00> : vector<16x16xf32>
    %87 = tpu.matmul %85, %84, %cst_37 {dimension_numbers = #tpu.dot_dimension_numbers<[1], [0], [0], [1], [0, 0, 1, 1], [], []>} : vector<16x8xbf16>, vector<8x16xbf16>, vector<16x16xf32> -> vector<16x16xf32>
    %cst_38 = arith.constant 0.176776692 : f32
    %88 = vector.broadcast %cst_38 : f32 to vector<16x16xf32>
    %89 = arith.mulf %87, %88 : vector<16x16xf32>
    %cst_39 = arith.constant dense<0xFF800000> : vector<16xf32>
    %90 = vector.multi_reduction <maximumf>, %89, %cst_39 [0] : vector<16x16xf32> to vector<16xf32>
    %91 = vector.shape_cast %90 : vector<16xf32> to vector<1x16xf32>
    %92 = vector.broadcast %91 : vector<1x16xf32> to vector<16x16xf32>
    %93 = arith.subf %89, %92 : vector<16x16xf32>
    %94 = math.exp %93 : vector<16x16xf32>
    %cst_40 = arith.constant dense<0.000000e+00> : vector<16xf32>
    %95 = vector.multi_reduction <add>, %94, %cst_40 [0] : vector<16x16xf32> to vector<16xf32>
    %96 = vector.shape_cast %95 : vector<16xf32> to vector<1x16xf32>
    %97 = tpu.reciprocal %96 {approx = true} : vector<1x16xf32> -> vector<1x16xf32>
    %98 = vector.broadcast %97 : vector<1x16xf32> to vector<16x16xf32>
    %99 = arith.mulf %94, %98 : vector<16x16xf32>
    %100 = arith.truncf %99 : vector<16x16xf32> to vector<16x16xbf16>
    %cst_41 = arith.constant dense<0.000000e+00> : vector<8x16xf32>
    %101 = tpu.matmul %86, %100, %cst_41 {dimension_numbers = #tpu.dot_dimension_numbers<[1], [0], [0], [1], [0, 0, 1, 1], [], []>} : vector<8x16xbf16>, vector<16x16xbf16>, vector<8x16xf32> -> vector<8x16xf32>
    %102 = tpu.concatenate %47, %65, %83, %101 in 0 : vector<8x16xf32>, vector<8x16xf32>, vector<8x16xf32>, vector<8x16xf32> -> vector<32x16xf32>
    %103 = vector.extract_strided_slice %27 {offsets = [0, 16], sizes = [8, 16], strides = [1, 1]} : vector<32x32xbf16> to vector<8x16xbf16>
    %104 = vector.extract_strided_slice %28 {offsets = [16, 0], sizes = [16, 8], strides = [1, 1]} : vector<32x32xbf16> to vector<16x8xbf16>
    %105 = vector.extract_strided_slice %29 {offsets = [0, 16], sizes = [8, 16], strides = [1, 1]} : vector<32x32xbf16> to vector<8x16xbf16>
    %cst_42 = arith.constant dense<0.000000e+00> : vector<16x16xf32>
    %106 = tpu.matmul %104, %103, %cst_42 {dimension_numbers = #tpu.dot_dimension_numbers<[1], [0], [0], [1], [0, 0, 1, 1], [], []>} : vector<16x8xbf16>, vector<8x16xbf16>, vector<16x16xf32> -> vector<16x16xf32>
    %cst_43 = arith.constant 0.176776692 : f32
    %107 = vector.broadcast %cst_43 : f32 to vector<16x16xf32>
    %108 = arith.mulf %106, %107 : vector<16x16xf32>
    %cst_44 = arith.constant dense<0xFF800000> : vector<16xf32>
    %109 = vector.multi_reduction <maximumf>, %108, %cst_44 [0] : vector<16x16xf32> to vector<16xf32>
    %110 = vector.shape_cast %109 : vector<16xf32> to vector<1x16xf32>
    %111 = vector.broadcast %110 : vector<1x16xf32> to vector<16x16xf32>
    %112 = arith.subf %108, %111 : vector<16x16xf32>
    %113 = math.exp %112 : vector<16x16xf32>
    %cst_45 = arith.constant dense<0.000000e+00> : vector<16xf32>
    %114 = vector.multi_reduction <add>, %113, %cst_45 [0] : vector<16x16xf32> to vector<16xf32>
    %115 = vector.shape_cast %114 : vector<16xf32> to vector<1x16xf32>
    %116 = tpu.reciprocal %115 {approx = true} : vector<1x16xf32> -> vector<1x16xf32>
    %117 = vector.broadcast %116 : vector<1x16xf32> to vector<16x16xf32>
    %118 = arith.mulf %113, %117 : vector<16x16xf32>
    %119 = arith.truncf %118 : vector<16x16xf32> to vector<16x16xbf16>
    %cst_46 = arith.constant dense<0.000000e+00> : vector<8x16xf32>
    %120 = tpu.matmul %105, %119, %cst_46 {dimension_numbers = #tpu.dot_dimension_numbers<[1], [0], [0], [1], [0, 0, 1, 1], [], []>} : vector<8x16xbf16>, vector<16x16xbf16>, vector<8x16xf32> -> vector<8x16xf32>
    %121 = vector.extract_strided_slice %27 {offsets = [8, 16], sizes = [8, 16], strides = [1, 1]} : vector<32x32xbf16> to vector<8x16xbf16>
    %122 = vector.extract_strided_slice %28 {offsets = [16, 8], sizes = [16, 8], strides = [1, 1]} : vector<32x32xbf16> to vector<16x8xbf16>
    %123 = vector.extract_strided_slice %29 {offsets = [8, 16], sizes = [8, 16], strides = [1, 1]} : vector<32x32xbf16> to vector<8x16xbf16>
    %cst_47 = arith.constant dense<0.000000e+00> : vector<16x16xf32>
    %124 = tpu.matmul %122, %121, %cst_47 {dimension_numbers = #tpu.dot_dimension_numbers<[1], [0], [0], [1], [0, 0, 1, 1], [], []>} : vector<16x8xbf16>, vector<8x16xbf16>, vector<16x16xf32> -> vector<16x16xf32>
    %cst_48 = arith.constant 0.176776692 : f32
    %125 = vector.broadcast %cst_48 : f32 to vector<16x16xf32>
    %126 = arith.mulf %124, %125 : vector<16x16xf32>
    %cst_49 = arith.constant dense<0xFF800000> : vector<16xf32>
    %127 = vector.multi_reduction <maximumf>, %126, %cst_49 [0] : vector<16x16xf32> to vector<16xf32>
    %128 = vector.shape_cast %127 : vector<16xf32> to vector<1x16xf32>
    %129 = vector.broadcast %128 : vector<1x16xf32> to vector<16x16xf32>
    %130 = arith.subf %126, %129 : vector<16x16xf32>
    %131 = math.exp %130 : vector<16x16xf32>
    %cst_50 = arith.constant dense<0.000000e+00> : vector<16xf32>
    %132 = vector.multi_reduction <add>, %131, %cst_50 [0] : vector<16x16xf32> to vector<16xf32>
    %133 = vector.shape_cast %132 : vector<16xf32> to vector<1x16xf32>
    %134 = tpu.reciprocal %133 {approx = true} : vector<1x16xf32> -> vector<1x16xf32>
    %135 = vector.broadcast %134 : vector<1x16xf32> to vector<16x16xf32>
    %136 = arith.mulf %131, %135 : vector<16x16xf32>
    %137 = arith.truncf %136 : vector<16x16xf32> to vector<16x16xbf16>
    %cst_51 = arith.constant dense<0.000000e+00> : vector<8x16xf32>
    %138 = tpu.matmul %123, %137, %cst_51 {dimension_numbers = #tpu.dot_dimension_numbers<[1], [0], [0], [1], [0, 0, 1, 1], [], []>} : vector<8x16xbf16>, vector<16x16xbf16>, vector<8x16xf32> -> vector<8x16xf32>
    %139 = vector.extract_strided_slice %27 {offsets = [16, 16], sizes = [8, 16], strides = [1, 1]} : vector<32x32xbf16> to vector<8x16xbf16>
    %140 = vector.extract_strided_slice %28 {offsets = [16, 16], sizes = [16, 8], strides = [1, 1]} : vector<32x32xbf16> to vector<16x8xbf16>
    %141 = vector.extract_strided_slice %29 {offsets = [16, 16], sizes = [8, 16], strides = [1, 1]} : vector<32x32xbf16> to vector<8x16xbf16>
    %cst_52 = arith.constant dense<0.000000e+00> : vector<16x16xf32>
    %142 = tpu.matmul %140, %139, %cst_52 {dimension_numbers = #tpu.dot_dimension_numbers<[1], [0], [0], [1], [0, 0, 1, 1], [], []>} : vector<16x8xbf16>, vector<8x16xbf16>, vector<16x16xf32> -> vector<16x16xf32>
    %cst_53 = arith.constant 0.176776692 : f32
    %143 = vector.broadcast %cst_53 : f32 to vector<16x16xf32>
    %144 = arith.mulf %142, %143 : vector<16x16xf32>
    %cst_54 = arith.constant dense<0xFF800000> : vector<16xf32>
    %145 = vector.multi_reduction <maximumf>, %144, %cst_54 [0] : vector<16x16xf32> to vector<16xf32>
    %146 = vector.shape_cast %145 : vector<16xf32> to vector<1x16xf32>
    %147 = vector.broadcast %146 : vector<1x16xf32> to vector<16x16xf32>
    %148 = arith.subf %144, %147 : vector<16x16xf32>
    %149 = math.exp %148 : vector<16x16xf32>
    %cst_55 = arith.constant dense<0.000000e+00> : vector<16xf32>
    %150 = vector.multi_reduction <add>, %149, %cst_55 [0] : vector<16x16xf32> to vector<16xf32>
    %151 = vector.shape_cast %150 : vector<16xf32> to vector<1x16xf32>
    %152 = tpu.reciprocal %151 {approx = true} : vector<1x16xf32> -> vector<1x16xf32>
    %153 = vector.broadcast %152 : vector<1x16xf32> to vector<16x16xf32>
    %154 = arith.mulf %149, %153 : vector<16x16xf32>
    %155 = arith.truncf %154 : vector<16x16xf32> to vector<16x16xbf16>
    %cst_56 = arith.constant dense<0.000000e+00> : vector<8x16xf32>
    %156 = tpu.matmul %141, %155, %cst_56 {dimension_numbers = #tpu.dot_dimension_numbers<[1], [0], [0], [1], [0, 0, 1, 1], [], []>} : vector<8x16xbf16>, vector<16x16xbf16>, vector<8x16xf32> -> vector<8x16xf32>
    %157 = vector.extract_strided_slice %27 {offsets = [24, 16], sizes = [8, 16], strides = [1, 1]} : vector<32x32xbf16> to vector<8x16xbf16>
    %158 = vector.extract_strided_slice %28 {offsets = [16, 24], sizes = [16, 8], strides = [1, 1]} : vector<32x32xbf16> to vector<16x8xbf16>
    %159 = vector.extract_strided_slice %29 {offsets = [24, 16], sizes = [8, 16], strides = [1, 1]} : vector<32x32xbf16> to vector<8x16xbf16>
    %cst_57 = arith.constant dense<0.000000e+00> : vector<16x16xf32>
    %160 = tpu.matmul %158, %157, %cst_57 {dimension_numbers = #tpu.dot_dimension_numbers<[1], [0], [0], [1], [0, 0, 1, 1], [], []>} : vector<16x8xbf16>, vector<8x16xbf16>, vector<16x16xf32> -> vector<16x16xf32>
    %cst_58 = arith.constant 0.176776692 : f32
    %161 = vector.broadcast %cst_58 : f32 to vector<16x16xf32>
    %162 = arith.mulf %160, %161 : vector<16x16xf32>
    %cst_59 = arith.constant dense<0xFF800000> : vector<16xf32>
    %163 = vector.multi_reduction <maximumf>, %162, %cst_59 [0] : vector<16x16xf32> to vector<16xf32>
    %164 = vector.shape_cast %163 : vector<16xf32> to vector<1x16xf32>
    %165 = vector.broadcast %164 : vector<1x16xf32> to vector<16x16xf32>
    %166 = arith.subf %162, %165 : vector<16x16xf32>
    %167 = math.exp %166 : vector<16x16xf32>
    %cst_60 = arith.constant dense<0.000000e+00> : vector<16xf32>
    %168 = vector.multi_reduction <add>, %167, %cst_60 [0] : vector<16x16xf32> to vector<16xf32>
    %169 = vector.shape_cast %168 : vector<16xf32> to vector<1x16xf32>
    %170 = tpu.reciprocal %169 {approx = true} : vector<1x16xf32> -> vector<1x16xf32>
    %171 = vector.broadcast %170 : vector<1x16xf32> to vector<16x16xf32>
    %172 = arith.mulf %167, %171 : vector<16x16xf32>
    %173 = arith.truncf %172 : vector<16x16xf32> to vector<16x16xbf16>
    %cst_61 = arith.constant dense<0.000000e+00> : vector<8x16xf32>
    %174 = tpu.matmul %159, %173, %cst_61 {dimension_numbers = #tpu.dot_dimension_numbers<[1], [0], [0], [1], [0, 0, 1, 1], [], []>} : vector<8x16xbf16>, vector<16x16xbf16>, vector<8x16xf32> -> vector<8x16xf32>
    %175 = tpu.concatenate %120, %138, %156, %174 in 0 : vector<8x16xf32>, vector<8x16xf32>, vector<8x16xf32>, vector<8x16xf32> -> vector<32x16xf32>
    %176 = tpu.concatenate %102, %175 in 1 : vector<32x16xf32>, vector<32x16xf32> -> vector<32x32xf32>
    %c0_62 = arith.constant 0 : index
    %c0_63 = arith.constant 0 : index
    %177 = vector.load %arg10[%c0_62, %c0_63] : memref<32x32xf32, #tpu.memory_space<vmem>>, vector<32x32xf32>
    %178 = arith.truncf %177 : vector<32x32xf32> to vector<32x32xbf16>
    %179 = arith.truncf %176 : vector<32x32xf32> to vector<32x32xbf16>
    %cst_64 = arith.constant dense<0.000000e+00> : vector<32x32xf32>
    %180 = tpu.matmul %178, %179, %cst_64 {dimension_numbers = #tpu.dot_dimension_numbers<[1], [0], [0], [1], [0, 0, 1, 1], [], []>} : vector<32x32xbf16>, vector<32x32xbf16>, vector<32x32xf32> -> vector<32x32xf32>
    %c0_65 = arith.constant 0 : index
    %c0_66 = arith.constant 0 : index
    %181 = vector.load %arg11[%c0_65, %c0_66] : memref<32x1xf32, #tpu.memory_space<vmem>>, vector<32x1xf32>
    %182 = vector.broadcast %181 : vector<32x1xf32> to vector<32x32xf32>
    %183 = arith.addf %180, %182 : vector<32x32xf32>
    %c0_67 = arith.constant 0 : index
    %c0_68 = arith.constant 0 : index
    %c0_69 = arith.constant 0 : index
    %184 = vector.load %arg12[%c0_67, %c0_68, %c0_69] : memref<1x32x32xf32, #tpu.memory_space<vmem>>, vector<1x32x32xf32>
    %185 = vector.shape_cast %184 : vector<1x32x32xf32> to vector<32x32xf32>
    %186 = vector.shape_cast %183 : vector<32x32xf32> to vector<1x32x32xf32>
    tpu.vector_store %arg12[%c0_67, %c0_68, %c0_69], %186 {strides = array<i32>} : memref<1x32x32xf32, #tpu.memory_space<vmem>>, vector<1x32x32xf32>,
    return
  }
  func.func @transform_0(%arg0: i32) -> (i32, i32, i32) {
    %c0_i32 = arith.constant 0 : i32
    %c0_i32_0 = arith.constant 0 : i32
    %c0_i32_1 = arith.constant 0 : i32
    return %arg0, %c0_i32, %c0_i32_0 : i32, i32, i32
  }
  func.func @transform_1(%arg0: i32) -> (i32, i32, i32) {
    %c0_i32 = arith.constant 0 : i32
    %c0_i32_0 = arith.constant 0 : i32
    %c0_i32_1 = arith.constant 0 : i32
    return %arg0, %c0_i32, %c0_i32_0 : i32, i32, i32
  }
  func.func @transform_2(%arg0: i32) -> (i32, i32, i32) {
    %c0_i32 = arith.constant 0 : i32
    %c0_i32_0 = arith.constant 0 : i32
    %c0_i32_1 = arith.constant 0 : i32
    return %arg0, %c0_i32, %c0_i32_0 : i32, i32, i32
  }
  func.func @transform_3(%arg0: i32) -> (i32, i32) {
    %c0_i32 = arith.constant 0 : i32
    %c0_i32_0 = arith.constant 0 : i32
    %c0_i32_1 = arith.constant 0 : i32
    return %c0_i32, %c0_i32_0 : i32, i32
  }
  func.func @transform_4(%arg0: i32) -> (i32, i32) {
    %c0_i32 = arith.constant 0 : i32
    %c0_i32_0 = arith.constant 0 : i32
    %c0_i32_1 = arith.constant 0 : i32
    return %c0_i32, %c0_i32_0 : i32, i32
  }
  func.func @transform_5(%arg0: i32) -> (i32, i32) {
    %c0_i32 = arith.constant 0 : i32
    %c0_i32_0 = arith.constant 0 : i32
    %c0_i32_1 = arith.constant 0 : i32
    return %c0_i32, %c0_i32_0 : i32, i32
  }
  func.func @transform_6(%arg0: i32) -> (i32, i32) {
    %c0_i32 = arith.constant 0 : i32
    %c0_i32_0 = arith.constant 0 : i32
    %c0_i32_1 = arith.constant 0 : i32
    return %c0_i32, %c0_i32_0 : i32, i32
  }
  func.func @transform_7(%arg0: i32) -> (i32, i32) {
    %c0_i32 = arith.constant 0 : i32
    %c0_i32_0 = arith.constant 0 : i32
    %c0_i32_1 = arith.constant 0 : i32
    return %c0_i32, %c0_i32_0 : i32, i32
  }
  func.func @transform_8(%arg0: i32) -> (i32, i32) {
    %c0_i32 = arith.constant 0 : i32
    %c0_i32_0 = arith.constant 0 : i32
    %c0_i32_1 = arith.constant 0 : i32
    return %c0_i32, %c0_i32_0 : i32, i32
  }
  func.func @transform_9(%arg0: i32) -> (i32, i32) {
    %c0_i32 = arith.constant 0 : i32
    %c0_i32_0 = arith.constant 0 : i32
    %c0_i32_1 = arith.constant 0 : i32
    return %c0_i32, %c0_i32_0 : i32, i32
  }
  func.func @transform_10(%arg0: i32) -> (i32, i32) {
    %c0_i32 = arith.constant 0 : i32
    %c0_i32_0 = arith.constant 0 : i32
    %c0_i32_1 = arith.constant 0 : i32
    return %c0_i32, %c0_i32_0 : i32, i32
  }
  func.func @transform_11(%arg0: i32) -> (i32, i32, i32) {
    %c0_i32 = arith.constant 0 : i32
    %c0_i32_0 = arith.constant 0 : i32
    %c0_i32_1 = arith.constant 0 : i32
    return %arg0, %c0_i32, %c0_i32_0 : i32, i32, i32
  }
}

</mosaic_0001>

<llo_original>
// kernel: tpu_custom_call.1
$region0: #{tpu_custom_call.1}
  #allocation0 [shape = 'u32[]', space=smem, size = 0x4, offset = 0x4, fixed_abs, tag = 'smem constant byte address 0x4 - core index']
  #allocation1 [shape = 'u32[144,128]{1,0:T(1,128)}', space=vmem, size = 0x12000, scoped, tag = 'internal scratch']
  %s0 = inlined_call_operand.vmem [shape: f32[1,32,32], index: 0, kind: input, shape index: {}]
  %s1 = inlined_call_operand.vmem [shape: f32[1,32,32], index: 1, kind: input, shape index: {}]
  %s2 = inlined_call_operand.vmem [shape: f32[1,32,32], index: 2, kind: input, shape index: {}]
  %s3 = inlined_call_operand.hbm [shape: f32[32,32], index: 3, kind: input, shape index: {}]
  %s4 = inlined_call_operand.vmem [shape: f32[32,1], index: 4, kind: input, shape index: {}]
  %s5 = inlined_call_operand.hbm [shape: f32[32,32], index: 5, kind: input, shape index: {}]
  %s6 = inlined_call_operand.vmem [shape: f32[1,32], index: 6, kind: input, shape index: {}]
  %s7 = inlined_call_operand.hbm [shape: f32[32,32], index: 7, kind: input, shape index: {}]
  %s8 = inlined_call_operand.vmem [shape: f32[32,1], index: 8, kind: input, shape index: {}]
  %s9 = inlined_call_operand.vmem [shape: f32[32,32], index: 9, kind: input, shape index: {}]
  %s10 = inlined_call_operand.vmem [shape: f32[32,1], index: 10, kind: input, shape index: {}]
  %s11 = inlined_call_operand.hbm [shape: f32[1,32,32], index: 11, kind: output, shape index: {}]
  %s12 = sld [smem:[#allocation0]]
  $region66: #{tpu_custom_call.1} parent=0
    _
  %s14 = ssub.s32 1, %s12
  %s15 = scalar_select 0, %s14, %s12
  $region1: #{tpu_custom_call.1} parent=0
    #allocation2 [shape = 'u8[16384]{0}', space=vmem, size = 0x4000, scoped, tag = 'input window, operand 3, single buffered']
    #allocation3 [shape = 's32[1]{0}', space=sflag, size = 0x4, scoped, tag = 'scoped memory for tpu_custom_call.1']
    #allocation4 [shape = 's32[1]{0}', space=sflag, size = 0x4, scoped, tag = 'scoped memory for tpu_custom_call.1']
    #allocation5 [shape = 'u8[16384]{0}', space=vmem, size = 0x4000, scoped, tag = 'input window, operand 5, single buffered']
    #allocation6 [shape = 's32[1]{0}', space=sflag, size = 0x4, scoped, tag = 'scoped memory for tpu_custom_call.1']
    #allocation7 [shape = 'u8[16384]{0}', space=vmem, size = 0x4000, scoped, tag = 'input window, operand 7, single buffered']
    #allocation8 [shape = 'u8[16384]{0}', space=vmem, size = 0x4000, scoped, tag = 'output window, operand 0, single buffered']
    %16 = vsyncpa [#allocation3], 0
    %17 = vsyncpa [#allocation6], 0
    %18 = vsyncpa [#allocation4], 0
    // Predicated region
    $region2: #{tpu_custom_call.1} parent=1 // pred_check
      _
    $region3: #{tpu_custom_call.1} parent=1 // pred_check_branch
      %20 = sbr.rel (0) target = $region5
    $region4: #{tpu_custom_call.1} parent=1 // pred_region
      _
    $region5: #{tpu_custom_call.1} parent=1 // pred_fallthru
      _
    // Predicated region
    $region6: #{tpu_custom_call.1} parent=1 // pred_check
      _
    $region7: #{tpu_custom_call.1} parent=1 // pred_check_branch
      %22 = sbr.rel (0) target = $region9
    $region8: #{tpu_custom_call.1} parent=1 // pred_region
      _
    $region9: #{tpu_custom_call.1} parent=1 // pred_fallthru
      _
    // Predicated region
    $region10: #{tpu_custom_call.1} parent=1 // pred_check
      _
    $region11: #{tpu_custom_call.1} parent=1 // pred_check_branch
      %24 = sbr.rel (0) target = $region13
    $region12: #{tpu_custom_call.1} parent=1 // pred_region
      _
    $region13: #{tpu_custom_call.1} parent=1 // pred_fallthru
      _
    // Predicated region
    $region14: #{tpu_custom_call.1} parent=1 // pred_check
      _
    $region15: #{tpu_custom_call.1} parent=1 // pred_check_branch
      %26 = sbr.rel (0) target = $region17
    $region16: #{tpu_custom_call.1} parent=1 // pred_region
      %s28 = ssub.s32 512, 512
      %29 = vsyncadd [#allocation3], %s28
      %s30 = sshll.u32 [#allocation2], 4
      %s31 = int_to_ptr.vmem [resolvable:$true] %s30
      %36 = dma.hbm_to_vmem [thread:$0]  %s3, 512, %s31, [#allocation3], 128, 128, 8
    $region17: #{tpu_custom_call.1} parent=1 // pred_fallthru
      _
    // Predicated region
    $region18: #{tpu_custom_call.1} parent=1 // pred_check
      _
    $region19: #{tpu_custom_call.1} parent=1 // pred_check_branch
      %38 = sbr.rel (0) target = $region21
    $region20: #{tpu_custom_call.1} parent=1 // pred_region
      _
    $region21: #{tpu_custom_call.1} parent=1 // pred_fallthru
      _
    // Predicated region
    $region22: #{tpu_custom_call.1} parent=1 // pred_check
      _
    $region23: #{tpu_custom_call.1} parent=1 // pred_check_branch
      %40 = sbr.rel (0) target = $region25
    $region24: #{tpu_custom_call.1} parent=1 // pred_region
      %s42 = ssub.s32 512, 512
      %43 = vsyncadd [#allocation6], %s42
      %s44 = sshll.u32 [#allocation5], 4
      %s45 = int_to_ptr.vmem [resolvable:$true] %s44
      %50 = dma.hbm_to_vmem [thread:$0]  %s5, 512, %s45, [#allocation6], 128, 128, 8
    $region25: #{tpu_custom_call.1} parent=1 // pred_fallthru
      _
    // Predicated region
    $region26: #{tpu_custom_call.1} parent=1 // pred_check
      _
    $region27: #{tpu_custom_call.1} parent=1 // pred_check_branch
      %52 = sbr.rel (0) target = $region29
    $region28: #{tpu_custom_call.1} parent=1 // pred_region
      _
    $region29: #{tpu_custom_call.1} parent=1 // pred_fallthru
      _
    // Predicated region
    $region30: #{tpu_custom_call.1} parent=1 // pred_check
      _
    $region31: #{tpu_custom_call.1} parent=1 // pred_check_branch
      %54 = sbr.rel (0) target = $region33
    $region32: #{tpu_custom_call.1} parent=1 // pred_region
      %s56 = ssub.s32 512, 512
      %57 = vsyncadd [#allocation6], %s56
      %s58 = sshll.u32 [#allocation7], 4
      %s59 = int_to_ptr.vmem [resolvable:$true] %s58
      %64 = dma.hbm_to_vmem [thread:$0]  %s7, 512, %s59, [#allocation6], 128, 128, 8
    $region33: #{tpu_custom_call.1} parent=1 // pred_fallthru
      _
    // Predicated region
    $region34: #{tpu_custom_call.1} parent=1 // pred_check
      _
    $region35: #{tpu_custom_call.1} parent=1 // pred_check_branch
      %66 = sbr.rel (0) target = $region37
    $region36: #{tpu_custom_call.1} parent=1 // pred_region
      _
    $region37: #{tpu_custom_call.1} parent=1 // pred_fallthru
      _
    // Predicated region
    $region38: #{tpu_custom_call.1} parent=1 // pred_check
      _
    $region39: #{tpu_custom_call.1} parent=1 // pred_check_branch
      %68 = sbr.rel (0) target = $region41
    $region40: #{tpu_custom_call.1} parent=1 // pred_region
      _
    $region41: #{tpu_custom_call.1} parent=1 // pred_fallthru
      _
    // Predicated region
    $region42: #{tpu_custom_call.1} parent=1 // pred_check
      _
    $region43: #{tpu_custom_call.1} parent=1 // pred_check_branch
      %70 = sbr.rel (0) target = $region45
    $region44: #{tpu_custom_call.1} parent=1 // pred_region
      _
    $region45: #{tpu_custom_call.1} parent=1 // pred_fallthru
      _
    // Predicated region
    $region46: #{tpu_custom_call.1} parent=1 // pred_check
      _
    $region47: #{tpu_custom_call.1} parent=1 // pred_check_branch
      %72 = sbr.rel (0) target = $region49
    $region48: #{tpu_custom_call.1} parent=1 // pred_region
      %73 = dma.done [#allocation3], 512
    $region49: #{tpu_custom_call.1} parent=1 // pred_fallthru
      _
    // Predicated region
    $region50: #{tpu_custom_call.1} parent=1 // pred_check
      _
    $region51: #{tpu_custom_call.1} parent=1 // pred_check_branch
      %75 = sbr.rel (0) target = $region53
    $region52: #{tpu_custom_call.1} parent=1 // pred_region
      %76 = dma.done [#allocation6], 512
    $region53: #{tpu_custom_call.1} parent=1 // pred_fallthru
      _
    // Predicated region
    $region54: #{tpu_custom_call.1} parent=1 // pred_check
      _
    $region55: #{tpu_custom_call.1} parent=1 // pred_check_branch
      %78 = sbr.rel (0) target = $region57
    $region56: #{tpu_custom_call.1} parent=1 // pred_region
      %79 = dma.done [#allocation6], 512
    $region57: #{tpu_custom_call.1} parent=1 // pred_fallthru
      _
    %v81 = vld [vmem:[%s0] sm:$0xff]
    %v82 = vld [vmem:[%s0 + $0x8] sm:$0xff]
    %v83 = vld [vmem:[%s0 + $0x10] sm:$0xff]
    %v84 = vld [vmem:[%s0 + $0x18] sm:$0xff]
    %v85 = vpack.c.bf16 %v82, %v81
    %v86 = vpack.c.bf16 %v84, %v83
    %v87 = vld [vmem:[%s1] sm:$0xff]
    %v88 = vld [vmem:[%s1 + $0x8] sm:$0xff]
    %v89 = vld [vmem:[%s1 + $0x10] sm:$0xff]
    %v90 = vld [vmem:[%s1 + $0x18] sm:$0xff]
    %v91 = vpack.c.bf16 %v88, %v87
    %v92 = vpack.c.bf16 %v90, %v89
    %v93 = vld [vmem:[%s2] sm:$0xff]
    %v94 = vld [vmem:[%s2 + $0x8] sm:$0xff]
    %v95 = vld [vmem:[%s2 + $0x10] sm:$0xff]
    %v96 = vld [vmem:[%s2 + $0x18] sm:$0xff]
    %v97 = vpack.c.bf16 %v94, %v93
    %v98 = vpack.c.bf16 %v96, %v95
    %v99 = vld [vmem:[#allocation2] sm:$0xff]
    %v100 = vld [vmem:[#allocation2 + $0x8] sm:$0xff]
    %v101 = vld [vmem:[#allocation2 + $0x10] sm:$0xff]
    %v102 = vld [vmem:[#allocation2 + $0x18] sm:$0xff]
    %v103 = vpack.c.bf16 %v100, %v99
    %v104 = vpack.c.bf16 %v102, %v101
    %v105 = vld [vmem:[%s4] sm:$0xff]
    %v106 = vld [vmem:[%s4 + $0x8] sm:$0xff]
    %v107 = vld [vmem:[%s4 + $0x10] sm:$0xff]
    %v108 = vld [vmem:[%s4 + $0x18] sm:$0xff]
    %110 = vset.pattern.permute.xlu0 0
    %111 = vperm.xlu0 %110, %v105
    %v112 = vpop.permute.xlu0 %111
    %115 = vset.pattern.permute.xlu0 0
    %116 = vperm.xlu0 %115, %v106
    %v117 = vpop.permute.xlu0 %116
    %120 = vset.pattern.permute.xlu0 0
    %121 = vperm.xlu0 %120, %v107
    %v122 = vpop.permute.xlu0 %121
    %125 = vset.pattern.permute.xlu0 0
    %126 = vperm.xlu0 %125, %v108
    %v127 = vpop.permute.xlu0 %126
    %vm129 = vcmask 261120
    %v131 = vsel %vm129, %v103, 0
    %v134 = vsel %vm129, %v104, 0
    %136 = vmatprep.subr.bf16.mxu0 0
    %137 = vmatpush1.bf16.msra.mxu0 %v85
    %138 = vmatprep.subr.bf16.mxu0 0
    %139 = vmatpush1.bf16.msra.mxu0 %v86
    %140 = vmatprep.subr.bf16.mxu0 0
    %141 = vmatpush1.bf16.msra.mxu0 0
    %142 = vmatprep.subr.bf16.mxu0 0
    %143 = vmatpush1.bf16.msra.mxu0 0
    %144 = vmatprep.subr.bf16.mxu0 0
    %145 = vmatpush1.bf16.msra.mxu0 0
    %146 = vmatprep.subr.bf16.mxu0 0
    %147 = vmatpush1.bf16.msra.mxu0 0
    %148 = vmatprep.subr.bf16.mxu0 0
    %149 = vmatpush1.bf16.msra.mxu0 0
    %150 = vmatprep.subr.bf16.mxu0 0
    %151 = vmatpush1.bf16.msra.mxu0 0
    %152 = vmatprep.subr.bf16.mxu0 0
    %153 = vmatpush1.bf16.msra.mxu0 0
    %154 = vmatprep.subr.bf16.mxu0 0
    %155 = vmatpush1.bf16.msra.mxu0 0
    %156 = vmatprep.subr.bf16.mxu0 0
    %157 = vmatpush1.bf16.msra.mxu0 0
    %158 = vmatprep.subr.bf16.mxu0 0
    %159 = vmatpush1.bf16.msra.mxu0 0
    %160 = vmatprep.subr.bf16.mxu0 0
    %161 = vmatpush1.bf16.msra.mxu0 0
    %162 = vmatprep.subr.bf16.mxu0 0
    %163 = vmatpush1.bf16.msra.mxu0 0
    %164 = vmatprep.subr.bf16.mxu0 0
    %165 = vmatpush1.bf16.msra.mxu0 0
    %166 = vmatprep.subr.bf16.mxu0 0
    %167 = vmatpush1.bf16.msra.mxu0 0
    %168 = vmatprep.mubr.bf16.mxu0 0
    %169 = vmatmul.mubr.bf16.gmra.mrb[0].mxu0 %v131
    %v170 = vpop.f32.mrb[0].mxu0
    %v171 = vadd.f32 %v112, %v170
    %v172 = vpop.f32.mrb[0].mxu0
    %v173 = vpop.f32.mrb[0].mxu0
    %v174 = vadd.f32 %v117, %v173
    %v175 = vpop.f32.mrb[0].mxu0
    %176 = vmatprep.mubr.bf16.mxu0 0
    %177 = vmatmul.mubr.bf16.gmra.mrb[0].mxu0 %v134
    %v178 = vpop.f32.mrb[0].mxu0
    %v179 = vadd.f32 %v122, %v178
    %v180 = vpop.f32.mrb[0].mxu0
    %v181 = vpop.f32.mrb[0].mxu0
    %v182 = vadd.f32 %v127, %v181
    %v183 = vpop.f32.mrb[0].mxu0
    %184 = vdwg.mxu0
    %v185 = vld [vmem:[#allocation5] sm:$0xff]
    %v186 = vld [vmem:[#allocation5 + $0x8] sm:$0xff]
    %v187 = vld [vmem:[#allocation5 + $0x10] sm:$0xff]
    %v188 = vld [vmem:[#allocation5 + $0x18] sm:$0xff]
    %v189 = vpack.c.bf16 %v186, %v185
    %v190 = vpack.c.bf16 %v188, %v187
    %v191 = vld [vmem:[%s6] sm:$0x1]
    %v193 = vlaneseq
    %v194 = vshrl.u32 %v193, 7
    %v195 = vsub.s32 0, %v194
    %v196 = vrot.slane %v191, %v195
    %v199 = vsel %vm129, %v91, 0
    %v202 = vsel %vm129, %v92, 0
    %204 = vmatprep.subr.bf16.mxu0 0
    %205 = vmatpush1.bf16.msra.mxu0 %v189
    %206 = vmatprep.subr.bf16.mxu0 0
    %207 = vmatpush1.bf16.msra.mxu0 %v190
    %208 = vmatprep.subr.bf16.mxu0 0
    %209 = vmatpush1.bf16.msra.mxu0 0
    %210 = vmatprep.subr.bf16.mxu0 0
    %211 = vmatpush1.bf16.msra.mxu0 0
    %212 = vmatprep.subr.bf16.mxu0 0
    %213 = vmatpush1.bf16.msra.mxu0 0
    %214 = vmatprep.subr.bf16.mxu0 0
    %215 = vmatpush1.bf16.msra.mxu0 0
    %216 = vmatprep.subr.bf16.mxu0 0
    %217 = vmatpush1.bf16.msra.mxu0 0
    %218 = vmatprep.subr.bf16.mxu0 0
    %219 = vmatpush1.bf16.msra.mxu0 0
    %220 = vmatprep.subr.bf16.mxu0 0
    %221 = vmatpush1.bf16.msra.mxu0 0
    %222 = vmatprep.subr.bf16.mxu0 0
    %223 = vmatpush1.bf16.msra.mxu0 0
    %224 = vmatprep.subr.bf16.mxu0 0
    %225 = vmatpush1.bf16.msra.mxu0 0
    %226 = vmatprep.subr.bf16.mxu0 0
    %227 = vmatpush1.bf16.msra.mxu0 0
    %228 = vmatprep.subr.bf16.mxu0 0
    %229 = vmatpush1.bf16.msra.mxu0 0
    %230 = vmatprep.subr.bf16.mxu0 0
    %231 = vmatpush1.bf16.msra.mxu0 0
    %232 = vmatprep.subr.bf16.mxu0 0
    %233 = vmatpush1.bf16.msra.mxu0 0
    %234 = vmatprep.subr.bf16.mxu0 0
    %235 = vmatpush1.bf16.msra.mxu0 0
    %236 = vmatprep.mubr.bf16.mxu0 0
    %237 = vmatmul.mubr.bf16.gmra.mrb[0].mxu0 %v199
    %v238 = vpop.f32.mrb[0].mxu0
    %v239 = vadd.f32 %v196, %v238
    %v240 = vpop.f32.mrb[0].mxu0
    %v241 = vpop.f32.mrb[0].mxu0
    %v242 = vadd.f32 %v196, %v241
    %v243 = vpop.f32.mrb[0].mxu0
    %244 = vmatprep.mubr.bf16.mxu0 0
    %245 = vmatmul.mubr.bf16.gmra.mrb[0].mxu0 %v202
    %v246 = vpop.f32.mrb[0].mxu0
    %v247 = vadd.f32 %v196, %v246
    %v248 = vpop.f32.mrb[0].mxu0
    %v249 = vpop.f32.mrb[0].mxu0
    %v250 = vadd.f32 %v196, %v249
    %v251 = vpop.f32.mrb[0].mxu0
    %252 = vdwg.mxu0
    %v253 = vld [vmem:[#allocation7] sm:$0xff]
    %v254 = vld [vmem:[#allocation7 + $0x8] sm:$0xff]
    %v255 = vld [vmem:[#allocation7 + $0x10] sm:$0xff]
    %v256 = vld [vmem:[#allocation7 + $0x18] sm:$0xff]
    %v257 = vpack.c.bf16 %v254, %v253
    %v258 = vpack.c.bf16 %v256, %v255
    %v259 = vld [vmem:[%s8] sm:$0xff]
    %v260 = vld [vmem:[%s8 + $0x8] sm:$0xff]
    %v261 = vld [vmem:[%s8 + $0x10] sm:$0xff]
    %v262 = vld [vmem:[%s8 + $0x18] sm:$0xff]
    %264 = vset.pattern.permute.xlu0 0
    %265 = vperm.xlu0 %264, %v259
    %v266 = vpop.permute.xlu0 %265
    %269 = vset.pattern.permute.xlu0 0
    %270 = vperm.xlu0 %269, %v260
    %v271 = vpop.permute.xlu0 %270
    %274 = vset.pattern.permute.xlu0 0
    %275 = vperm.xlu0 %274, %v261
    %v276 = vpop.permute.xlu0 %275
    %279 = vset.pattern.permute.xlu0 0
    %280 = vperm.xlu0 %279, %v262
    %v281 = vpop.permute.xlu0 %280
    %v284 = vsel %vm129, %v257, 0
    %v287 = vsel %vm129, %v258, 0
    %289 = vmatprep.subr.bf16.mxu0 0
    %290 = vmatpush1.bf16.msra.mxu0 %v97
    %291 = vmatprep.subr.bf16.mxu0 0
    %292 = vmatpush1.bf16.msra.mxu0 %v98
    %293 = vmatprep.subr.bf16.mxu0 0
    %294 = vmatpush1.bf16.msra.mxu0 0
    %295 = vmatprep.subr.bf16.mxu0 0
    %296 = vmatpush1.bf16.msra.mxu0 0
    %297 = vmatprep.subr.bf16.mxu0 0
    %298 = vmatpush1.bf16.msra.mxu0 0
    %299 = vmatprep.subr.bf16.mxu0 0
    %300 = vmatpush1.bf16.msra.mxu0 0
    %301 = vmatprep.subr.bf16.mxu0 0
    %302 = vmatpush1.bf16.msra.mxu0 0
    %303 = vmatprep.subr.bf16.mxu0 0
    %304 = vmatpush1.bf16.msra.mxu0 0
    %305 = vmatprep.subr.bf16.mxu0 0
    %306 = vmatpush1.bf16.msra.mxu0 0
    %307 = vmatprep.subr.bf16.mxu0 0
    %308 = vmatpush1.bf16.msra.mxu0 0
    %309 = vmatprep.subr.bf16.mxu0 0
    %310 = vmatpush1.bf16.msra.mxu0 0
    %311 = vmatprep.subr.bf16.mxu0 0
    %312 = vmatpush1.bf16.msra.mxu0 0
    %313 = vmatprep.subr.bf16.mxu0 0
    %314 = vmatpush1.bf16.msra.mxu0 0
    %315 = vmatprep.subr.bf16.mxu0 0
    %316 = vmatpush1.bf16.msra.mxu0 0
    %317 = vmatprep.subr.bf16.mxu0 0
    %318 = vmatpush1.bf16.msra.mxu0 0
    %319 = vmatprep.subr.bf16.mxu0 0
    %320 = vmatpush1.bf16.msra.mxu0 0
    %321 = vmatprep.mubr.bf16.mxu0 0
    %322 = vmatmul.mubr.bf16.gmra.mrb[0].mxu0 %v284
    %v323 = vpop.f32.mrb[0].mxu0
    %v324 = vadd.f32 %v266, %v323
    %v325 = vpop.f32.mrb[0].mxu0
    %v326 = vpop.f32.mrb[0].mxu0
    %v327 = vadd.f32 %v271, %v326
    %v328 = vpop.f32.mrb[0].mxu0
    %329 = vmatprep.mubr.bf16.mxu0 0
    %330 = vmatmul.mubr.bf16.gmra.mrb[0].mxu0 %v287
    %v331 = vpop.f32.mrb[0].mxu0
    %v332 = vadd.f32 %v276, %v331
    %v333 = vpop.f32.mrb[0].mxu0
    %v334 = vpop.f32.mrb[0].mxu0
    %v335 = vadd.f32 %v281, %v334
    %v336 = vpop.f32.mrb[0].mxu0
    %337 = vdwg.mxu0
    %v338 = vpack.c.bf16 %v174, %v171
    %v339 = vpack.c.bf16 %v182, %v179
    %v340 = vpack.c.bf16 %v242, %v239
    %v341 = vpack.c.bf16 %v250, %v247
    %v342 = vpack.c.bf16 %v327, %v324
    %v343 = vpack.c.bf16 %v335, %v332
    %vm344 = vcmask 64512
    %v346 = vsel %vm344, %v340, 0
    %vm348 = vcmask 1043456
    %v350 = vsel %vm348, %v338, 0
    %352 = vmatprep.subr.bf16.mxu0 0
    %353 = vmatpush1.bf16.msra.mxu0 %v350
    %354 = vmatprep.subr.bf16.mxu0 0
    %355 = vmatpush1.bf16.msra.mxu0 0
    %356 = vmatprep.subr.bf16.mxu0 0
    %357 = vmatpush1.bf16.msra.mxu0 0
    %358 = vmatprep.subr.bf16.mxu0 0
    %359 = vmatpush1.bf16.msra.mxu0 0
    %360 = vmatprep.subr.bf16.mxu0 0
    %361 = vmatpush1.bf16.msra.mxu0 0
    %362 = vmatprep.subr.bf16.mxu0 0
    %363 = vmatpush1.bf16.msra.mxu0 0
    %364 = vmatprep.subr.bf16.mxu0 0
    %365 = vmatpush1.bf16.msra.mxu0 0
    %366 = vmatprep.subr.bf16.mxu0 0
    %367 = vmatpush1.bf16.msra.mxu0 0
    %368 = vmatprep.subr.bf16.mxu0 0
    %369 = vmatpush1.bf16.msra.mxu0 0
    %370 = vmatprep.subr.bf16.mxu0 0
    %371 = vmatpush1.bf16.msra.mxu0 0
    %372 = vmatprep.subr.bf16.mxu0 0
    %373 = vmatpush1.bf16.msra.mxu0 0
    %374 = vmatprep.subr.bf16.mxu0 0
    %375 = vmatpush1.bf16.msra.mxu0 0
    %376 = vmatprep.subr.bf16.mxu0 0
    %377 = vmatpush1.bf16.msra.mxu0 0
    %378 = vmatprep.subr.bf16.mxu0 0
    %379 = vmatpush1.bf16.msra.mxu0 0
    %380 = vmatprep.subr.bf16.mxu0 0
    %381 = vmatpush1.bf16.msra.mxu0 0
    %382 = vmatprep.subr.bf16.mxu0 0
    %383 = vmatpush1.bf16.msra.mxu0 0
    %384 = vmatprep.mubr.bf16.mxu0 0
    %385 = vmatmul.mubr.bf16.gmra.mrb[0].mxu0 %v346
    %v386 = vpop.f32.mrb[0].mxu0
    %v387 = vadd.f32 0.0, %v386
    %v388 = vpop.f32.mrb[0].mxu0
    %v389 = vpop.f32.mrb[0].mxu0
    %v390 = vadd.f32 0.0, %v389
    %v391 = vpop.f32.mrb[0].mxu0
    %392 = vdwg.mxu0
    %v393 = vmul.f32 %v387, 0.17677669
    %v394 = vmul.f32 %v390, 0.17677669
    %vm395 = vcmask 130048
    %v396 = vsel %vm395, %v393, -inf
    %v397 = vsel %vm395, %v394, -inf
    %v398 = vmax.f32 %v396, %v397
    %v399 = vrot.slane %v398, 4
    %v400 = vmax.f32 %v398, %v399
    %v401 = vrot.slane %v400, 2
    %v402 = vmax.f32 %v400, %v401
    %v403 = vrot.slane %v402, 1
    %v404 = vmax.f32 %v402, %v403
    %v405 = vsub.f32 %v393, %v404
    %v406 = vsub.f32 %v394, %v404
    %v407 = vmul.f32 %v405, 1.442695
    %v408 = vpow.pop %v407
    %v409 = vmul.f32 %v406, 1.442695
    %v410 = vpow.pop %v409
    %v411 = vsel %vm395, %v408, 0.0
    %v412 = vsel %vm395, %v410, 0.0
    %v413 = vadd.f32 %v411, %v412
    %v414 = vrot.slane %v413, 4
    %v415 = vadd.f32 %v413, %v414
    %v416 = vrot.slane %v415, 2
    %v417 = vadd.f32 %v415, %v416
    %v418 = vrot.slane %v417, 1
    %v419 = vadd.f32 %v417, %v418
    %v420 = vrcp.pop %v419
    %v421 = vmul.f32 %v408, %v420
    %v422 = vmul.f32 %v410, %v420
    %v423 = vpack.c.bf16 %v422, %v421
    %v425 = vsel %vm395, %v342, 0
    %427 = vmatprep.subr.bf16.mxu0 0
    %428 = vmatpush1.bf16.msra.mxu0 %v423
    %429 = vmatprep.subr.bf16.mxu0 0
    %430 = vmatpush1.bf16.msra.mxu0 0
    %431 = vmatprep.subr.bf16.mxu0 0
    %432 = vmatpush1.bf16.msra.mxu0 0
    %433 = vmatprep.subr.bf16.mxu0 0
    %434 = vmatpush1.bf16.msra.mxu0 0
    %435 = vmatprep.subr.bf16.mxu0 0
    %436 = vmatpush1.bf16.msra.mxu0 0
    %437 = vmatprep.subr.bf16.mxu0 0
    %438 = vmatpush1.bf16.msra.mxu0 0
    %439 = vmatprep.subr.bf16.mxu0 0
    %440 = vmatpush1.bf16.msra.mxu0 0
    %441 = vmatprep.subr.bf16.mxu0 0
    %442 = vmatpush1.bf16.msra.mxu0 0
    %443 = vmatprep.subr.bf16.mxu0 0
    %444 = vmatpush1.bf16.msra.mxu0 0
    %445 = vmatprep.subr.bf16.mxu0 0
    %446 = vmatpush1.bf16.msra.mxu0 0
    %447 = vmatprep.subr.bf16.mxu0 0
    %448 = vmatpush1.bf16.msra.mxu0 0
    %449 = vmatprep.subr.bf16.mxu0 0
    %450 = vmatpush1.bf16.msra.mxu0 0
    %451 = vmatprep.subr.bf16.mxu0 0
    %452 = vmatpush1.bf16.msra.mxu0 0
    %453 = vmatprep.subr.bf16.mxu0 0
    %454 = vmatpush1.bf16.msra.mxu0 0
    %455 = vmatprep.subr.bf16.mxu0 0
    %456 = vmatpush1.bf16.msra.mxu0 0
    %457 = vmatprep.subr.bf16.mxu0 0
    %458 = vmatpush1.bf16.msra.mxu0 0
    %459 = vmatprep.mubr.bf16.mxu0 0
    %460 = vmatmul.mubr.bf16.gmra.mrb[0].mxu0 %v425
    %v461 = vpop.f32.mrb[0].mxu0
    %v462 = vadd.f32 0.0, %v461
    %v463 = vpop.f32.mrb[0].mxu0
    %v464 = vpop.f32.mrb[0].mxu0
    %v465 = vpop.f32.mrb[0].mxu0
    %466 = vdwg.mxu0
    %468 = vrot.lane.b32.xlu0 %v340, 120
    %v469 = vpop.permute.xlu0 %468
    %v471 = vrot.slane %v338, 4
    %v473 = vsel %vm344, %v469, 0
    %v476 = vsel %vm348, %v471, 0
    %478 = vmatprep.subr.bf16.mxu0 0
    %479 = vmatpush1.bf16.msra.mxu0 %v476
    %480 = vmatprep.subr.bf16.mxu0 0
    %481 = vmatpush1.bf16.msra.mxu0 0
    %482 = vmatprep.subr.bf16.mxu0 0
    %483 = vmatpush1.bf16.msra.mxu0 0
    %484 = vmatprep.subr.bf16.mxu0 0
    %485 = vmatpush1.bf16.msra.mxu0 0
    %486 = vmatprep.subr.bf16.mxu0 0
    %487 = vmatpush1.bf16.msra.mxu0 0
    %488 = vmatprep.subr.bf16.mxu0 0
    %489 = vmatpush1.bf16.msra.mxu0 0
    %490 = vmatprep.subr.bf16.mxu0 0
    %491 = vmatpush1.bf16.msra.mxu0 0
    %492 = vmatprep.subr.bf16.mxu0 0
    %493 = vmatpush1.bf16.msra.mxu0 0
    %494 = vmatprep.subr.bf16.mxu0 0
    %495 = vmatpush1.bf16.msra.mxu0 0
    %496 = vmatprep.subr.bf16.mxu0 0
    %497 = vmatpush1.bf16.msra.mxu0 0
    %498 = vmatprep.subr.bf16.mxu0 0
    %499 = vmatpush1.bf16.msra.mxu0 0
    %500 = vmatprep.subr.bf16.mxu0 0
    %501 = vmatpush1.bf16.msra.mxu0 0
    %502 = vmatprep.subr.bf16.mxu0 0
    %503 = vmatpush1.bf16.msra.mxu0 0
    %504 = vmatprep.subr.bf16.mxu0 0
    %505 = vmatpush1.bf16.msra.mxu0 0
    %506 = vmatprep.subr.bf16.mxu0 0
    %507 = vmatpush1.bf16.msra.mxu0 0
    %508 = vmatprep.subr.bf16.mxu0 0
    %509 = vmatpush1.bf16.msra.mxu0 0
    %510 = vmatprep.mubr.bf16.mxu0 0
    %511 = vmatmul.mubr.bf16.gmra.mrb[0].mxu0 %v473
    %v512 = vpop.f32.mrb[0].mxu0
    %v513 = vadd.f32 0.0, %v512
    %v514 = vpop.f32.mrb[0].mxu0
    %v515 = vpop.f32.mrb[0].mxu0
    %v516 = vadd.f32 0.0, %v515
    %v517 = vpop.f32.mrb[0].mxu0
    %518 = vdwg.mxu0
    %v519 = vmul.f32 %v513, 0.17677669
    %v520 = vmul.f32 %v516, 0.17677669
    %v521 = vsel %vm395, %v519, -inf
    %v522 = vsel %vm395, %v520, -inf
    %v523 = vmax.f32 %v521, %v522
    %v524 = vrot.slane %v523, 4
    %v525 = vmax.f32 %v523, %v524
    %v526 = vrot.slane %v525, 2
    %v527 = vmax.f32 %v525, %v526
    %v528 = vrot.slane %v527, 1
    %v529 = vmax.f32 %v527, %v528
    %v530 = vsub.f32 %v519, %v529
    %v531 = vsub.f32 %v520, %v529
    %v532 = vmul.f32 %v530, 1.442695
    %v533 = vpow.pop %v532
    %v534 = vmul.f32 %v531, 1.442695
    %v535 = vpow.pop %v534
    %v536 = vsel %vm395, %v533, 0.0
    %v537 = vsel %vm395, %v535, 0.0
    %v538 = vadd.f32 %v536, %v537
    %v539 = vrot.slane %v538, 4
    %v540 = vadd.f32 %v538, %v539
    %v541 = vrot.slane %v540, 2
    %v542 = vadd.f32 %v540, %v541
    %v543 = vrot.slane %v542, 1
    %v544 = vadd.f32 %v542, %v543
    %v545 = vrcp.pop %v544
    %v546 = vmul.f32 %v533, %v545
    %v547 = vmul.f32 %v535, %v545
    %v548 = vpack.c.bf16 %v547, %v546
    %v550 = vrot.slane %v342, 4
    %v552 = vsel %vm395, %v550, 0
    %554 = vmatprep.subr.bf16.mxu0 0
    %555 = vmatpush1.bf16.msra.mxu0 %v548
    %556 = vmatprep.subr.bf16.mxu0 0
    %557 = vmatpush1.bf16.msra.mxu0 0
    %558 = vmatprep.subr.bf16.mxu0 0
    %559 = vmatpush1.bf16.msra.mxu0 0
    %560 = vmatprep.subr.bf16.mxu0 0
    %561 = vmatpush1.bf16.msra.mxu0 0
    %562 = vmatprep.subr.bf16.mxu0 0
    %563 = vmatpush1.bf16.msra.mxu0 0
    %564 = vmatprep.subr.bf16.mxu0 0
    %565 = vmatpush1.bf16.msra.mxu0 0
    %566 = vmatprep.subr.bf16.mxu0 0
    %567 = vmatpush1.bf16.msra.mxu0 0
    %568 = vmatprep.subr.bf16.mxu0 0
    %569 = vmatpush1.bf16.msra.mxu0 0
    %570 = vmatprep.subr.bf16.mxu0 0
    %571 = vmatpush1.bf16.msra.mxu0 0
    %572 = vmatprep.subr.bf16.mxu0 0
    %573 = vmatpush1.bf16.msra.mxu0 0
    %574 = vmatprep.subr.bf16.mxu0 0
    %575 = vmatpush1.bf16.msra.mxu0 0
    %576 = vmatprep.subr.bf16.mxu0 0
    %577 = vmatpush1.bf16.msra.mxu0 0
    %578 = vmatprep.subr.bf16.mxu0 0
    %579 = vmatpush1.bf16.msra.mxu0 0
    %580 = vmatprep.subr.bf16.mxu0 0
    %581 = vmatpush1.bf16.msra.mxu0 0
    %582 = vmatprep.subr.bf16.mxu0 0
    %583 = vmatpush1.bf16.msra.mxu0 0
    %584 = vmatprep.subr.bf16.mxu0 0
    %585 = vmatpush1.bf16.msra.mxu0 0
    %586 = vmatprep.mubr.bf16.mxu0 0
    %587 = vmatmul.mubr.bf16.gmra.mrb[0].mxu0 %v552
    %v588 = vpop.f32.mrb[0].mxu0
    %v589 = vadd.f32 0.0, %v588
    %v590 = vpop.f32.mrb[0].mxu0
    %v591 = vpop.f32.mrb[0].mxu0
    %v592 = vpop.f32.mrb[0].mxu0
    %593 = vdwg.mxu0
    %594 = vrot.lane.b32.xlu0 %v340, 112
    %v595 = vpop.permute.xlu0 %594
    %v597 = vsel %vm344, %v595, 0
    %v600 = vsel %vm348, %v339, 0
    %602 = vmatprep.subr.bf16.mxu0 0
    %603 = vmatpush1.bf16.msra.mxu0 %v600
    %604 = vmatprep.subr.bf16.mxu0 0
    %605 = vmatpush1.bf16.msra.mxu0 0
    %606 = vmatprep.subr.bf16.mxu0 0
    %607 = vmatpush1.bf16.msra.mxu0 0
    %608 = vmatprep.subr.bf16.mxu0 0
    %609 = vmatpush1.bf16.msra.mxu0 0
    %610 = vmatprep.subr.bf16.mxu0 0
    %611 = vmatpush1.bf16.msra.mxu0 0
    %612 = vmatprep.subr.bf16.mxu0 0
    %613 = vmatpush1.bf16.msra.mxu0 0
    %614 = vmatprep.subr.bf16.mxu0 0
    %615 = vmatpush1.bf16.msra.mxu0 0
    %616 = vmatprep.subr.bf16.mxu0 0
    %617 = vmatpush1.bf16.msra.mxu0 0
    %618 = vmatprep.subr.bf16.mxu0 0
    %619 = vmatpush1.bf16.msra.mxu0 0
    %620 = vmatprep.subr.bf16.mxu0 0
    %621 = vmatpush1.bf16.msra.mxu0 0
    %622 = vmatprep.subr.bf16.mxu0 0
    %623 = vmatpush1.bf16.msra.mxu0 0
    %624 = vmatprep.subr.bf16.mxu0 0
    %625 = vmatpush1.bf16.msra.mxu0 0
    %626 = vmatprep.subr.bf16.mxu0 0
    %627 = vmatpush1.bf16.msra.mxu0 0
    %628 = vmatprep.subr.bf16.mxu0 0
    %629 = vmatpush1.bf16.msra.mxu0 0
    %630 = vmatprep.subr.bf16.mxu0 0
    %631 = vmatpush1.bf16.msra.mxu0 0
    %632 = vmatprep.subr.bf16.mxu0 0
    %633 = vmatpush1.bf16.msra.mxu0 0
    %634 = vmatprep.mubr.bf16.mxu0 0
    %635 = vmatmul.mubr.bf16.gmra.mrb[0].mxu0 %v597
    %v636 = vpop.f32.mrb[0].mxu0
    %v637 = vadd.f32 0.0, %v636
    %v638 = vpop.f32.mrb[0].mxu0
    %v639 = vpop.f32.mrb[0].mxu0
    %v640 = vadd.f32 0.0, %v639
    %v641 = vpop.f32.mrb[0].mxu0
    %642 = vdwg.mxu0
    %v643 = vmul.f32 %v637, 0.17677669
    %v644 = vmul.f32 %v640, 0.17677669
    %v645 = vsel %vm395, %v643, -inf
    %v646 = vsel %vm395, %v644, -inf
    %v647 = vmax.f32 %v645, %v646
    %v648 = vrot.slane %v647, 4
    %v649 = vmax.f32 %v647, %v648
    %v650 = vrot.slane %v649, 2
    %v651 = vmax.f32 %v649, %v650
    %v652 = vrot.slane %v651, 1
    %v653 = vmax.f32 %v651, %v652
    %v654 = vsub.f32 %v643, %v653
    %v655 = vsub.f32 %v644, %v653
    %v656 = vmul.f32 %v654, 1.442695
    %v657 = vpow.pop %v656
    %v658 = vmul.f32 %v655, 1.442695
    %v659 = vpow.pop %v658
    %v660 = vsel %vm395, %v657, 0.0
    %v661 = vsel %vm395, %v659, 0.0
    %v662 = vadd.f32 %v660, %v661
    %v663 = vrot.slane %v662, 4
    %v664 = vadd.f32 %v662, %v663
    %v665 = vrot.slane %v664, 2
    %v666 = vadd.f32 %v664, %v665
    %v667 = vrot.slane %v666, 1
    %v668 = vadd.f32 %v666, %v667
    %v669 = vrcp.pop %v668
    %v670 = vmul.f32 %v657, %v669
    %v671 = vmul.f32 %v659, %v669
    %v672 = vpack.c.bf16 %v671, %v670
    %v674 = vsel %vm395, %v343, 0
    %676 = vmatprep.subr.bf16.mxu0 0
    %677 = vmatpush1.bf16.msra.mxu0 %v672
    %678 = vmatprep.subr.bf16.mxu0 0
    %679 = vmatpush1.bf16.msra.mxu0 0
    %680 = vmatprep.subr.bf16.mxu0 0
    %681 = vmatpush1.bf16.msra.mxu0 0
    %682 = vmatprep.subr.bf16.mxu0 0
    %683 = vmatpush1.bf16.msra.mxu0 0
    %684 = vmatprep.subr.bf16.mxu0 0
    %685 = vmatpush1.bf16.msra.mxu0 0
    %686 = vmatprep.subr.bf16.mxu0 0
    %687 = vmatpush1.bf16.msra.mxu0 0
    %688 = vmatprep.subr.bf16.mxu0 0
    %689 = vmatpush1.bf16.msra.mxu0 0
    %690 = vmatprep.subr.bf16.mxu0 0
    %691 = vmatpush1.bf16.msra.mxu0 0
    %692 = vmatprep.subr.bf16.mxu0 0
    %693 = vmatpush1.bf16.msra.mxu0 0
    %694 = vmatprep.subr.bf16.mxu0 0
    %695 = vmatpush1.bf16.msra.mxu0 0
    %696 = vmatprep.subr.bf16.mxu0 0
    %697 = vmatpush1.bf16.msra.mxu0 0
    %698 = vmatprep.subr.bf16.mxu0 0
    %699 = vmatpush1.bf16.msra.mxu0 0
    %700 = vmatprep.subr.bf16.mxu0 0
    %701 = vmatpush1.bf16.msra.mxu0 0
    %702 = vmatprep.subr.bf16.mxu0 0
    %703 = vmatpush1.bf16.msra.mxu0 0
    %704 = vmatprep.subr.bf16.mxu0 0
    %705 = vmatpush1.bf16.msra.mxu0 0
    %706 = vmatprep.subr.bf16.mxu0 0
    %707 = vmatpush1.bf16.msra.mxu0 0
    %708 = vmatprep.mubr.bf16.mxu0 0
    %709 = vmatmul.mubr.bf16.gmra.mrb[0].mxu0 %v674
    %v710 = vpop.f32.mrb[0].mxu0
    %v711 = vadd.f32 0.0, %v710
    %v712 = vpop.f32.mrb[0].mxu0
    %v713 = vpop.f32.mrb[0].mxu0
    %v714 = vpop.f32.mrb[0].mxu0
    %715 = vdwg.mxu0
    %716 = vrot.lane.b32.xlu0 %v340, 104
    %v717 = vpop.permute.xlu0 %716
    %v719 = vrot.slane %v339, 4
    %v721 = vsel %vm344, %v717, 0
    %v724 = vsel %vm348, %v719, 0
    %726 = vmatprep.subr.bf16.mxu0 0
    %727 = vmatpush1.bf16.msra.mxu0 %v724
    %728 = vmatprep.subr.bf16.mxu0 0
    %729 = vmatpush1.bf16.msra.mxu0 0
    %730 = vmatprep.subr.bf16.mxu0 0
    %731 = vmatpush1.bf16.msra.mxu0 0
    %732 = vmatprep.subr.bf16.mxu0 0
    %733 = vmatpush1.bf16.msra.mxu0 0
    %734 = vmatprep.subr.bf16.mxu0 0
    %735 = vmatpush1.bf16.msra.mxu0 0
    %736 = vmatprep.subr.bf16.mxu0 0
    %737 = vmatpush1.bf16.msra.mxu0 0
    %738 = vmatprep.subr.bf16.mxu0 0
    %739 = vmatpush1.bf16.msra.mxu0 0
    %740 = vmatprep.subr.bf16.mxu0 0
    %741 = vmatpush1.bf16.msra.mxu0 0
    %742 = vmatprep.subr.bf16.mxu0 0
    %743 = vmatpush1.bf16.msra.mxu0 0
    %744 = vmatprep.subr.bf16.mxu0 0
    %745 = vmatpush1.bf16.msra.mxu0 0
    %746 = vmatprep.subr.bf16.mxu0 0
    %747 = vmatpush1.bf16.msra.mxu0 0
    %748 = vmatprep.subr.bf16.mxu0 0
    %749 = vmatpush1.bf16.msra.mxu0 0
    %750 = vmatprep.subr.bf16.mxu0 0
    %751 = vmatpush1.bf16.msra.mxu0 0
    %752 = vmatprep.subr.bf16.mxu0 0
    %753 = vmatpush1.bf16.msra.mxu0 0
    %754 = vmatprep.subr.bf16.mxu0 0
    %755 = vmatpush1.bf16.msra.mxu0 0
    %756 = vmatprep.subr.bf16.mxu0 0
    %757 = vmatpush1.bf16.msra.mxu0 0
    %758 = vmatprep.mubr.bf16.mxu0 0
    %759 = vmatmul.mubr.bf16.gmra.mrb[0].mxu0 %v721
    %v760 = vpop.f32.mrb[0].mxu0
    %v761 = vadd.f32 0.0, %v760
    %v762 = vpop.f32.mrb[0].mxu0
    %v763 = vpop.f32.mrb[0].mxu0
    %v764 = vadd.f32 0.0, %v763
    %v765 = vpop.f32.mrb[0].mxu0
    %766 = vdwg.mxu0
    %v767 = vmul.f32 %v761, 0.17677669
    %v768 = vmul.f32 %v764, 0.17677669
    %v769 = vsel %vm395, %v767, -inf
    %v770 = vsel %vm395, %v768, -inf
    %v771 = vmax.f32 %v769, %v770
    %v772 = vrot.slane %v771, 4
    %v773 = vmax.f32 %v771, %v772
    %v774 = vrot.slane %v773, 2
    %v775 = vmax.f32 %v773, %v774
    %v776 = vrot.slane %v775, 1
    %v777 = vmax.f32 %v775, %v776
    %v778 = vsub.f32 %v767, %v777
    %v779 = vsub.f32 %v768, %v777
    %v780 = vmul.f32 %v778, 1.442695
    %v781 = vpow.pop %v780
    %v782 = vmul.f32 %v779, 1.442695
    %v783 = vpow.pop %v782
    %v784 = vsel %vm395, %v781, 0.0
    %v785 = vsel %vm395, %v783, 0.0
    %v786 = vadd.f32 %v784, %v785
    %v787 = vrot.slane %v786, 4
    %v788 = vadd.f32 %v786, %v787
    %v789 = vrot.slane %v788, 2
    %v790 = vadd.f32 %v788, %v789
    %v791 = vrot.slane %v790, 1
    %v792 = vadd.f32 %v790, %v791
    %v793 = vrcp.pop %v792
    %v794 = vmul.f32 %v781, %v793
    %v795 = vmul.f32 %v783, %v793
    %v796 = vpack.c.bf16 %v795, %v794
    %v798 = vrot.slane %v343, 4
    %v800 = vsel %vm395, %v798, 0
    %802 = vmatprep.subr.bf16.mxu0 0
    %803 = vmatpush1.bf16.msra.mxu0 %v796
    %804 = vmatprep.subr.bf16.mxu0 0
    %805 = vmatpush1.bf16.msra.mxu0 0
    %806 = vmatprep.subr.bf16.mxu0 0
    %807 = vmatpush1.bf16.msra.mxu0 0
    %808 = vmatprep.subr.bf16.mxu0 0
    %809 = vmatpush1.bf16.msra.mxu0 0
    %810 = vmatprep.subr.bf16.mxu0 0
    %811 = vmatpush1.bf16.msra.mxu0 0
    %812 = vmatprep.subr.bf16.mxu0 0
    %813 = vmatpush1.bf16.msra.mxu0 0
    %814 = vmatprep.subr.bf16.mxu0 0
    %815 = vmatpush1.bf16.msra.mxu0 0
    %816 = vmatprep.subr.bf16.mxu0 0
    %817 = vmatpush1.bf16.msra.mxu0 0
    %818 = vmatprep.subr.bf16.mxu0 0
    %819 = vmatpush1.bf16.msra.mxu0 0
    %820 = vmatprep.subr.bf16.mxu0 0
    %821 = vmatpush1.bf16.msra.mxu0 0
    %822 = vmatprep.subr.bf16.mxu0 0
    %823 = vmatpush1.bf16.msra.mxu0 0
    %824 = vmatprep.subr.bf16.mxu0 0
    %825 = vmatpush1.bf16.msra.mxu0 0
    %826 = vmatprep.subr.bf16.mxu0 0
    %827 = vmatpush1.bf16.msra.mxu0 0
    %828 = vmatprep.subr.bf16.mxu0 0
    %829 = vmatpush1.bf16.msra.mxu0 0
    %830 = vmatprep.subr.bf16.mxu0 0
    %831 = vmatpush1.bf16.msra.mxu0 0
    %832 = vmatprep.subr.bf16.mxu0 0
    %833 = vmatpush1.bf16.msra.mxu0 0
    %834 = vmatprep.mubr.bf16.mxu0 0
    %835 = vmatmul.mubr.bf16.gmra.mrb[0].mxu0 %v800
    %v836 = vpop.f32.mrb[0].mxu0
    %v837 = vadd.f32 0.0, %v836
    %v838 = vpop.f32.mrb[0].mxu0
    %v839 = vpop.f32.mrb[0].mxu0
    %v840 = vpop.f32.mrb[0].mxu0
    %841 = vdwg.mxu0
    %842 = vrot.lane.b32.xlu0 %v338, 112
    %v843 = vpop.permute.xlu0 %842
    %v845 = vsel %vm344, %v341, 0
    %v848 = vsel %vm348, %v843, 0
    %850 = vmatprep.subr.bf16.mxu0 0
    %851 = vmatpush1.bf16.msra.mxu0 %v848
    %852 = vmatprep.subr.bf16.mxu0 0
    %853 = vmatpush1.bf16.msra.mxu0 0
    %854 = vmatprep.subr.bf16.mxu0 0
    %855 = vmatpush1.bf16.msra.mxu0 0
    %856 = vmatprep.subr.bf16.mxu0 0
    %857 = vmatpush1.bf16.msra.mxu0 0
    %858 = vmatprep.subr.bf16.mxu0 0
    %859 = vmatpush1.bf16.msra.mxu0 0
    %860 = vmatprep.subr.bf16.mxu0 0
    %861 = vmatpush1.bf16.msra.mxu0 0
    %862 = vmatprep.subr.bf16.mxu0 0
    %863 = vmatpush1.bf16.msra.mxu0 0
    %864 = vmatprep.subr.bf16.mxu0 0
    %865 = vmatpush1.bf16.msra.mxu0 0
    %866 = vmatprep.subr.bf16.mxu0 0
    %867 = vmatpush1.bf16.msra.mxu0 0
    %868 = vmatprep.subr.bf16.mxu0 0
    %869 = vmatpush1.bf16.msra.mxu0 0
    %870 = vmatprep.subr.bf16.mxu0 0
    %871 = vmatpush1.bf16.msra.mxu0 0
    %872 = vmatprep.subr.bf16.mxu0 0
    %873 = vmatpush1.bf16.msra.mxu0 0
    %874 = vmatprep.subr.bf16.mxu0 0
    %875 = vmatpush1.bf16.msra.mxu0 0
    %876 = vmatprep.subr.bf16.mxu0 0
    %877 = vmatpush1.bf16.msra.mxu0 0
    %878 = vmatprep.subr.bf16.mxu0 0
    %879 = vmatpush1.bf16.msra.mxu0 0
    %880 = vmatprep.subr.bf16.mxu0 0
    %881 = vmatpush1.bf16.msra.mxu0 0
    %882 = vmatprep.mubr.bf16.mxu0 0
    %883 = vmatmul.mubr.bf16.gmra.mrb[0].mxu0 %v845
    %v884 = vpop.f32.mrb[0].mxu0
    %v885 = vadd.f32 0.0, %v884
    %v886 = vpop.f32.mrb[0].mxu0
    %v887 = vpop.f32.mrb[0].mxu0
    %v888 = vadd.f32 0.0, %v887
    %v889 = vpop.f32.mrb[0].mxu0
    %890 = vdwg.mxu0
    %v891 = vmul.f32 %v885, 0.17677669
    %v892 = vmul.f32 %v888, 0.17677669
    %v893 = vsel %vm395, %v891, -inf
    %v894 = vsel %vm395, %v892, -inf
    %v895 = vmax.f32 %v893, %v894
    %v896 = vrot.slane %v895, 4
    %v897 = vmax.f32 %v895, %v896
    %v898 = vrot.slane %v897, 2
    %v899 = vmax.f32 %v897, %v898
    %v900 = vrot.slane %v899, 1
    %v901 = vmax.f32 %v899, %v900
    %v902 = vsub.f32 %v891, %v901
    %v903 = vsub.f32 %v892, %v901
    %v904 = vmul.f32 %v902, 1.442695
    %v905 = vpow.pop %v904
    %v906 = vmul.f32 %v903, 1.442695
    %v907 = vpow.pop %v906
    %v908 = vsel %vm395, %v905, 0.0
    %v909 = vsel %vm395, %v907, 0.0
    %v910 = vadd.f32 %v908, %v909
    %v911 = vrot.slane %v910, 4
    %v912 = vadd.f32 %v910, %v911
    %v913 = vrot.slane %v912, 2
    %v914 = vadd.f32 %v912, %v913
    %v915 = vrot.slane %v914, 1
    %v916 = vadd.f32 %v914, %v915
    %v917 = vrcp.pop %v916
    %v918 = vmul.f32 %v905, %v917
    %v919 = vmul.f32 %v907, %v917
    %v920 = vpack.c.bf16 %v919, %v918
    %921 = vrot.lane.b32.xlu0 %v342, 112
    %v922 = vpop.permute.xlu0 %921
    %v924 = vsel %vm395, %v922, 0
    %926 = vmatprep.subr.bf16.mxu0 0
    %927 = vmatpush1.bf16.msra.mxu0 %v920
    %928 = vmatprep.subr.bf16.mxu0 0
    %929 = vmatpush1.bf16.msra.mxu0 0
    %930 = vmatprep.subr.bf16.mxu0 0
    %931 = vmatpush1.bf16.msra.mxu0 0
    %932 = vmatprep.subr.bf16.mxu0 0
    %933 = vmatpush1.bf16.msra.mxu0 0
    %934 = vmatprep.subr.bf16.mxu0 0
    %935 = vmatpush1.bf16.msra.mxu0 0
    %936 = vmatprep.subr.bf16.mxu0 0
    %937 = vmatpush1.bf16.msra.mxu0 0
    %938 = vmatprep.subr.bf16.mxu0 0
    %939 = vmatpush1.bf16.msra.mxu0 0
    %940 = vmatprep.subr.bf16.mxu0 0
    %941 = vmatpush1.bf16.msra.mxu0 0
    %942 = vmatprep.subr.bf16.mxu0 0
    %943 = vmatpush1.bf16.msra.mxu0 0
    %944 = vmatprep.subr.bf16.mxu0 0
    %945 = vmatpush1.bf16.msra.mxu0 0
    %946 = vmatprep.subr.bf16.mxu0 0
    %947 = vmatpush1.bf16.msra.mxu0 0
    %948 = vmatprep.subr.bf16.mxu0 0
    %949 = vmatpush1.bf16.msra.mxu0 0
    %950 = vmatprep.subr.bf16.mxu0 0
    %951 = vmatpush1.bf16.msra.mxu0 0
    %952 = vmatprep.subr.bf16.mxu0 0
    %953 = vmatpush1.bf16.msra.mxu0 0
    %954 = vmatprep.subr.bf16.mxu0 0
    %955 = vmatpush1.bf16.msra.mxu0 0
    %956 = vmatprep.subr.bf16.mxu0 0
    %957 = vmatpush1.bf16.msra.mxu0 0
    %958 = vmatprep.mubr.bf16.mxu0 0
    %959 = vmatmul.mubr.bf16.gmra.mrb[0].mxu0 %v924
    %v960 = vpop.f32.mrb[0].mxu0
    %v961 = vadd.f32 0.0, %v960
    %v962 = vpop.f32.mrb[0].mxu0
    %v963 = vpop.f32.mrb[0].mxu0
    %v964 = vpop.f32.mrb[0].mxu0
    %965 = vdwg.mxu0
    %967 = vrot.lane.b32.xlu0 %v341, 120
    %v968 = vpop.permute.xlu0 %967
    %969 = vrot.lane.b32.xlu0 %v471, 112
    %v970 = vpop.permute.xlu0 %969
    %v972 = vsel %vm344, %v968, 0
    %v975 = vsel %vm348, %v970, 0
    %977 = vmatprep.subr.bf16.mxu0 0
    %978 = vmatpush1.bf16.msra.mxu0 %v975
    %979 = vmatprep.subr.bf16.mxu0 0
    %980 = vmatpush1.bf16.msra.mxu0 0
    %981 = vmatprep.subr.bf16.mxu0 0
    %982 = vmatpush1.bf16.msra.mxu0 0
    %983 = vmatprep.subr.bf16.mxu0 0
    %984 = vmatpush1.bf16.msra.mxu0 0
    %985 = vmatprep.subr.bf16.mxu0 0
    %986 = vmatpush1.bf16.msra.mxu0 0
    %987 = vmatprep.subr.bf16.mxu0 0
    %988 = vmatpush1.bf16.msra.mxu0 0
    %989 = vmatprep.subr.bf16.mxu0 0
    %990 = vmatpush1.bf16.msra.mxu0 0
    %991 = vmatprep.subr.bf16.mxu0 0
    %992 = vmatpush1.bf16.msra.mxu0 0
    %993 = vmatprep.subr.bf16.mxu0 0
    %994 = vmatpush1.bf16.msra.mxu0 0
    %995 = vmatprep.subr.bf16.mxu0 0
    %996 = vmatpush1.bf16.msra.mxu0 0
    %997 = vmatprep.subr.bf16.mxu0 0
    %998 = vmatpush1.bf16.msra.mxu0 0
    %999 = vmatprep.subr.bf16.mxu0 0
    %1000 = vmatpush1.bf16.msra.mxu0 0
    %1001 = vmatprep.subr.bf16.mxu0 0
    %1002 = vmatpush1.bf16.msra.mxu0 0
    %1003 = vmatprep.subr.bf16.mxu0 0
    %1004 = vmatpush1.bf16.msra.mxu0 0
    %1005 = vmatprep.subr.bf16.mxu0 0
    %1006 = vmatpush1.bf16.msra.mxu0 0
    %1007 = vmatprep.subr.bf16.mxu0 0
    %1008 = vmatpush1.bf16.msra.mxu0 0
    %1009 = vmatprep.mubr.bf16.mxu0 0
    %1010 = vmatmul.mubr.bf16.gmra.mrb[0].mxu0 %v972
    %v1011 = vpop.f32.mrb[0].mxu0
    %v1012 = vadd.f32 0.0, %v1011
    %v1013 = vpop.f32.mrb[0].mxu0
    %v1014 = vpop.f32.mrb[0].mxu0
    %v1015 = vadd.f32 0.0, %v1014
    %v1016 = vpop.f32.mrb[0].mxu0
    %1017 = vdwg.mxu0
    %v1018 = vmul.f32 %v1012, 0.17677669
    %v1019 = vmul.f32 %v1015, 0.17677669
    %v1020 = vsel %vm395, %v1018, -inf
    %v1021 = vsel %vm395, %v1019, -inf
    %v1022 = vmax.f32 %v1020, %v1021
    %v1023 = vrot.slane %v1022, 4
    %v1024 = vmax.f32 %v1022, %v1023
    %v1025 = vrot.slane %v1024, 2
    %v1026 = vmax.f32 %v1024, %v1025
    %v1027 = vrot.slane %v1026, 1
    %v1028 = vmax.f32 %v1026, %v1027
    %v1029 = vsub.f32 %v1018, %v1028
    %v1030 = vsub.f32 %v1019, %v1028
    %v1031 = vmul.f32 %v1029, 1.442695
    %v1032 = vpow.pop %v1031
    %v1033 = vmul.f32 %v1030, 1.442695
    %v1034 = vpow.pop %v1033
    %v1035 = vsel %vm395, %v1032, 0.0
    %v1036 = vsel %vm395, %v1034, 0.0
    %v1037 = vadd.f32 %v1035, %v1036
    %v1038 = vrot.slane %v1037, 4
    %v1039 = vadd.f32 %v1037, %v1038
    %v1040 = vrot.slane %v1039, 2
    %v1041 = vadd.f32 %v1039, %v1040
    %v1042 = vrot.slane %v1041, 1
    %v1043 = vadd.f32 %v1041, %v1042
    %v1044 = vrcp.pop %v1043
    %v1045 = vmul.f32 %v1032, %v1044
    %v1046 = vmul.f32 %v1034, %v1044
    %v1047 = vpack.c.bf16 %v1046, %v1045
    %1048 = vrot.lane.b32.xlu0 %v550, 112
    %v1049 = vpop.permute.xlu0 %1048
    %v1051 = vsel %vm395, %v1049, 0
    %1053 = vmatprep.subr.bf16.mxu0 0
    %1054 = vmatpush1.bf16.msra.mxu0 %v1047
    %1055 = vmatprep.subr.bf16.mxu0 0
    %1056 = vmatpush1.bf16.msra.mxu0 0
    %1057 = vmatprep.subr.bf16.mxu0 0
    %1058 = vmatpush1.bf16.msra.mxu0 0
    %1059 = vmatprep.subr.bf16.mxu0 0
    %1060 = vmatpush1.bf16.msra.mxu0 0
    %1061 = vmatprep.subr.bf16.mxu0 0
    %1062 = vmatpush1.bf16.msra.mxu0 0
    %1063 = vmatprep.subr.bf16.mxu0 0
    %1064 = vmatpush1.bf16.msra.mxu0 0
    %1065 = vmatprep.subr.bf16.mxu0 0
    %1066 = vmatpush1.bf16.msra.mxu0 0
    %1067 = vmatprep.subr.bf16.mxu0 0
    %1068 = vmatpush1.bf16.msra.mxu0 0
    %1069 = vmatprep.subr.bf16.mxu0 0
    %1070 = vmatpush1.bf16.msra.mxu0 0
    %1071 = vmatprep.subr.bf16.mxu0 0
    %1072 = vmatpush1.bf16.msra.mxu0 0
    %1073 = vmatprep.subr.bf16.mxu0 0
    %1074 = vmatpush1.bf16.msra.mxu0 0
    %1075 = vmatprep.subr.bf16.mxu0 0
    %1076 = vmatpush1.bf16.msra.mxu0 0
    %1077 = vmatprep.subr.bf16.mxu0 0
    %1078 = vmatpush1.bf16.msra.mxu0 0
    %1079 = vmatprep.subr.bf16.mxu0 0
    %1080 = vmatpush1.bf16.msra.mxu0 0
    %1081 = vmatprep.subr.bf16.mxu0 0
    %1082 = vmatpush1.bf16.msra.mxu0 0
    %1083 = vmatprep.subr.bf16.mxu0 0
    %1084 = vmatpush1.bf16.msra.mxu0 0
    %1085 = vmatprep.mubr.bf16.mxu0 0
    %1086 = vmatmul.mubr.bf16.gmra.mrb[0].mxu0 %v1051
    %v1087 = vpop.f32.mrb[0].mxu0
    %v1088 = vadd.f32 0.0, %v1087
    %v1089 = vpop.f32.mrb[0].mxu0
    %v1090 = vpop.f32.mrb[0].mxu0
    %v1091 = vpop.f32.mrb[0].mxu0
    %1092 = vdwg.mxu0
    %1093 = vrot.lane.b32.xlu0 %v341, 112
    %v1094 = vpop.permute.xlu0 %1093
    %1095 = vrot.lane.b32.xlu0 %v339, 112
    %v1096 = vpop.permute.xlu0 %1095
    %v1098 = vsel %vm344, %v1094, 0
    %v1101 = vsel %vm348, %v1096, 0
    %1103 = vmatprep.subr.bf16.mxu0 0
    %1104 = vmatpush1.bf16.msra.mxu0 %v1101
    %1105 = vmatprep.subr.bf16.mxu0 0
    %1106 = vmatpush1.bf16.msra.mxu0 0
    %1107 = vmatprep.subr.bf16.mxu0 0
    %1108 = vmatpush1.bf16.msra.mxu0 0
    %1109 = vmatprep.subr.bf16.mxu0 0
    %1110 = vmatpush1.bf16.msra.mxu0 0
    %1111 = vmatprep.subr.bf16.mxu0 0
    %1112 = vmatpush1.bf16.msra.mxu0 0
    %1113 = vmatprep.subr.bf16.mxu0 0
    %1114 = vmatpush1.bf16.msra.mxu0 0
    %1115 = vmatprep.subr.bf16.mxu0 0
    %1116 = vmatpush1.bf16.msra.mxu0 0
    %1117 = vmatprep.subr.bf16.mxu0 0
    %1118 = vmatpush1.bf16.msra.mxu0 0
    %1119 = vmatprep.subr.bf16.mxu0 0
    %1120 = vmatpush1.bf16.msra.mxu0 0
    %1121 = vmatprep.subr.bf16.mxu0 0
    %1122 = vmatpush1.bf16.msra.mxu0 0
    %1123 = vmatprep.subr.bf16.mxu0 0
    %1124 = vmatpush1.bf16.msra.mxu0 0
    %1125 = vmatprep.subr.bf16.mxu0 0
    %1126 = vmatpush1.bf16.msra.mxu0 0
    %1127 = vmatprep.subr.bf16.mxu0 0
    %1128 = vmatpush1.bf16.msra.mxu0 0
    %1129 = vmatprep.subr.bf16.mxu0 0
    %1130 = vmatpush1.bf16.msra.mxu0 0
    %1131 = vmatprep.subr.bf16.mxu0 0
    %1132 = vmatpush1.bf16.msra.mxu0 0
    %1133 = vmatprep.subr.bf16.mxu0 0
    %1134 = vmatpush1.bf16.msra.mxu0 0
    %1135 = vmatprep.mubr.bf16.mxu0 0
    %1136 = vmatmul.mubr.bf16.gmra.mrb[0].mxu0 %v1098
    %v1137 = vpop.f32.mrb[0].mxu0
    %v1138 = vadd.f32 0.0, %v1137
    %v1139 = vpop.f32.mrb[0].mxu0
    %v1140 = vpop.f32.mrb[0].mxu0
    %v1141 = vadd.f32 0.0, %v1140
    %v1142 = vpop.f32.mrb[0].mxu0
    %1143 = vdwg.mxu0
    %v1144 = vmul.f32 %v1138, 0.17677669
    %v1145 = vmul.f32 %v1141, 0.17677669
    %v1146 = vsel %vm395, %v1144, -inf
    %v1147 = vsel %vm395, %v1145, -inf
    %v1148 = vmax.f32 %v1146, %v1147
    %v1149 = vrot.slane %v1148, 4
    %v1150 = vmax.f32 %v1148, %v1149
    %v1151 = vrot.slane %v1150, 2
    %v1152 = vmax.f32 %v1150, %v1151
    %v1153 = vrot.slane %v1152, 1
    %v1154 = vmax.f32 %v1152, %v1153
    %v1155 = vsub.f32 %v1144, %v1154
    %v1156 = vsub.f32 %v1145, %v1154
    %v1157 = vmul.f32 %v1155, 1.442695
    %v1158 = vpow.pop %v1157
    %v1159 = vmul.f32 %v1156, 1.442695
    %v1160 = vpow.pop %v1159
    %v1161 = vsel %vm395, %v1158, 0.0
    %v1162 = vsel %vm395, %v1160, 0.0
    %v1163 = vadd.f32 %v1161, %v1162
    %v1164 = vrot.slane %v1163, 4
    %v1165 = vadd.f32 %v1163, %v1164
    %v1166 = vrot.slane %v1165, 2
    %v1167 = vadd.f32 %v1165, %v1166
    %v1168 = vrot.slane %v1167, 1
    %v1169 = vadd.f32 %v1167, %v1168
    %v1170 = vrcp.pop %v1169
    %v1171 = vmul.f32 %v1158, %v1170
    %v1172 = vmul.f32 %v1160, %v1170
    %v1173 = vpack.c.bf16 %v1172, %v1171
    %1174 = vrot.lane.b32.xlu0 %v343, 112
    %v1175 = vpop.permute.xlu0 %1174
    %v1177 = vsel %vm395, %v1175, 0
    %1179 = vmatprep.subr.bf16.mxu0 0
    %1180 = vmatpush1.bf16.msra.mxu0 %v1173
    %1181 = vmatprep.subr.bf16.mxu0 0
    %1182 = vmatpush1.bf16.msra.mxu0 0
    %1183 = vmatprep.subr.bf16.mxu0 0
    %1184 = vmatpush1.bf16.msra.mxu0 0
    %1185 = vmatprep.subr.bf16.mxu0 0
    %1186 = vmatpush1.bf16.msra.mxu0 0
    %1187 = vmatprep.subr.bf16.mxu0 0
    %1188 = vmatpush1.bf16.msra.mxu0 0
    %1189 = vmatprep.subr.bf16.mxu0 0
    %1190 = vmatpush1.bf16.msra.mxu0 0
    %1191 = vmatprep.subr.bf16.mxu0 0
    %1192 = vmatpush1.bf16.msra.mxu0 0
    %1193 = vmatprep.subr.bf16.mxu0 0
    %1194 = vmatpush1.bf16.msra.mxu0 0
    %1195 = vmatprep.subr.bf16.mxu0 0
    %1196 = vmatpush1.bf16.msra.mxu0 0
    %1197 = vmatprep.subr.bf16.mxu0 0
    %1198 = vmatpush1.bf16.msra.mxu0 0
    %1199 = vmatprep.subr.bf16.mxu0 0
    %1200 = vmatpush1.bf16.msra.mxu0 0
    %1201 = vmatprep.subr.bf16.mxu0 0
    %1202 = vmatpush1.bf16.msra.mxu0 0
    %1203 = vmatprep.subr.bf16.mxu0 0
    %1204 = vmatpush1.bf16.msra.mxu0 0
    %1205 = vmatprep.subr.bf16.mxu0 0
    %1206 = vmatpush1.bf16.msra.mxu0 0
    %1207 = vmatprep.subr.bf16.mxu0 0
    %1208 = vmatpush1.bf16.msra.mxu0 0
    %1209 = vmatprep.subr.bf16.mxu0 0
    %1210 = vmatpush1.bf16.msra.mxu0 0
    %1211 = vmatprep.mubr.bf16.mxu0 0
    %1212 = vmatmul.mubr.bf16.gmra.mrb[0].mxu0 %v1177
    %v1213 = vpop.f32.mrb[0].mxu0
    %v1214 = vadd.f32 0.0, %v1213
    %v1215 = vpop.f32.mrb[0].mxu0
    %v1216 = vpop.f32.mrb[0].mxu0
    %v1217 = vpop.f32.mrb[0].mxu0
    %1218 = vdwg.mxu0
    %1219 = vrot.lane.b32.xlu0 %v341, 104
    %v1220 = vpop.permute.xlu0 %1219
    %1221 = vrot.lane.b32.xlu0 %v719, 112
    %v1222 = vpop.permute.xlu0 %1221
    %v1224 = vsel %vm344, %v1220, 0
    %v1227 = vsel %vm348, %v1222, 0
    %1229 = vmatprep.subr.bf16.mxu0 0
    %1230 = vmatpush1.bf16.msra.mxu0 %v1227
    %1231 = vmatprep.subr.bf16.mxu0 0
    %1232 = vmatpush1.bf16.msra.mxu0 0
    %1233 = vmatprep.subr.bf16.mxu0 0
    %1234 = vmatpush1.bf16.msra.mxu0 0
    %1235 = vmatprep.subr.bf16.mxu0 0
    %1236 = vmatpush1.bf16.msra.mxu0 0
    %1237 = vmatprep.subr.bf16.mxu0 0
    %1238 = vmatpush1.bf16.msra.mxu0 0
    %1239 = vmatprep.subr.bf16.mxu0 0
    %1240 = vmatpush1.bf16.msra.mxu0 0
    %1241 = vmatprep.subr.bf16.mxu0 0
    %1242 = vmatpush1.bf16.msra.mxu0 0
    %1243 = vmatprep.subr.bf16.mxu0 0
    %1244 = vmatpush1.bf16.msra.mxu0 0
    %1245 = vmatprep.subr.bf16.mxu0 0
    %1246 = vmatpush1.bf16.msra.mxu0 0
    %1247 = vmatprep.subr.bf16.mxu0 0
    %1248 = vmatpush1.bf16.msra.mxu0 0
    %1249 = vmatprep.subr.bf16.mxu0 0
    %1250 = vmatpush1.bf16.msra.mxu0 0
    %1251 = vmatprep.subr.bf16.mxu0 0
    %1252 = vmatpush1.bf16.msra.mxu0 0
    %1253 = vmatprep.subr.bf16.mxu0 0
    %1254 = vmatpush1.bf16.msra.mxu0 0
    %1255 = vmatprep.subr.bf16.mxu0 0
    %1256 = vmatpush1.bf16.msra.mxu0 0
    %1257 = vmatprep.subr.bf16.mxu0 0
    %1258 = vmatpush1.bf16.msra.mxu0 0
    %1259 = vmatprep.subr.bf16.mxu0 0
    %1260 = vmatpush1.bf16.msra.mxu0 0
    %1261 = vmatprep.mubr.bf16.mxu0 0
    %1262 = vmatmul.mubr.bf16.gmra.mrb[0].mxu0 %v1224
    %v1263 = vpop.f32.mrb[0].mxu0
    %v1264 = vadd.f32 0.0, %v1263
    %v1265 = vpop.f32.mrb[0].mxu0
    %v1266 = vpop.f32.mrb[0].mxu0
    %v1267 = vadd.f32 0.0, %v1266
    %v1268 = vpop.f32.mrb[0].mxu0
    %1269 = vdwg.mxu0
    %v1270 = vmul.f32 %v1264, 0.17677669
    %v1271 = vmul.f32 %v1267, 0.17677669
    %v1272 = vsel %vm395, %v1270, -inf
    %v1273 = vsel %vm395, %v1271, -inf
    %v1274 = vmax.f32 %v1272, %v1273
    %v1275 = vrot.slane %v1274, 4
    %v1276 = vmax.f32 %v1274, %v1275
    %v1277 = vrot.slane %v1276, 2
    %v1278 = vmax.f32 %v1276, %v1277
    %v1279 = vrot.slane %v1278, 1
    %v1280 = vmax.f32 %v1278, %v1279
    %v1281 = vsub.f32 %v1270, %v1280
    %v1282 = vsub.f32 %v1271, %v1280
    %v1283 = vmul.f32 %v1281, 1.442695
    %v1284 = vpow.pop %v1283
    %v1285 = vmul.f32 %v1282, 1.442695
    %v1286 = vpow.pop %v1285
    %v1287 = vsel %vm395, %v1284, 0.0
    %v1288 = vsel %vm395, %v1286, 0.0
    %v1289 = vadd.f32 %v1287, %v1288
    %v1290 = vrot.slane %v1289, 4
    %v1291 = vadd.f32 %v1289, %v1290
    %v1292 = vrot.slane %v1291, 2
    %v1293 = vadd.f32 %v1291, %v1292
    %v1294 = vrot.slane %v1293, 1
    %v1295 = vadd.f32 %v1293, %v1294
    %v1296 = vrcp.pop %v1295
    %v1297 = vmul.f32 %v1284, %v1296
    %v1298 = vmul.f32 %v1286, %v1296
    %v1299 = vpack.c.bf16 %v1298, %v1297
    %1300 = vrot.lane.b32.xlu0 %v798, 112
    %v1301 = vpop.permute.xlu0 %1300
    %v1303 = vsel %vm395, %v1301, 0
    %1305 = vmatprep.subr.bf16.mxu0 0
    %1306 = vmatpush1.bf16.msra.mxu0 %v1299
    %1307 = vmatprep.subr.bf16.mxu0 0
    %1308 = vmatpush1.bf16.msra.mxu0 0
    %1309 = vmatprep.subr.bf16.mxu0 0
    %1310 = vmatpush1.bf16.msra.mxu0 0
    %1311 = vmatprep.subr.bf16.mxu0 0
    %1312 = vmatpush1.bf16.msra.mxu0 0
    %1313 = vmatprep.subr.bf16.mxu0 0
    %1314 = vmatpush1.bf16.msra.mxu0 0
    %1315 = vmatprep.subr.bf16.mxu0 0
    %1316 = vmatpush1.bf16.msra.mxu0 0
    %1317 = vmatprep.subr.bf16.mxu0 0
    %1318 = vmatpush1.bf16.msra.mxu0 0
    %1319 = vmatprep.subr.bf16.mxu0 0
    %1320 = vmatpush1.bf16.msra.mxu0 0
    %1321 = vmatprep.subr.bf16.mxu0 0
    %1322 = vmatpush1.bf16.msra.mxu0 0
    %1323 = vmatprep.subr.bf16.mxu0 0
    %1324 = vmatpush1.bf16.msra.mxu0 0
    %1325 = vmatprep.subr.bf16.mxu0 0
    %1326 = vmatpush1.bf16.msra.mxu0 0
    %1327 = vmatprep.subr.bf16.mxu0 0
    %1328 = vmatpush1.bf16.msra.mxu0 0
    %1329 = vmatprep.subr.bf16.mxu0 0
    %1330 = vmatpush1.bf16.msra.mxu0 0
    %1331 = vmatprep.subr.bf16.mxu0 0
    %1332 = vmatpush1.bf16.msra.mxu0 0
    %1333 = vmatprep.subr.bf16.mxu0 0
    %1334 = vmatpush1.bf16.msra.mxu0 0
    %1335 = vmatprep.subr.bf16.mxu0 0
    %1336 = vmatpush1.bf16.msra.mxu0 0
    %1337 = vmatprep.mubr.bf16.mxu0 0
    %1338 = vmatmul.mubr.bf16.gmra.mrb[0].mxu0 %v1303
    %v1339 = vpop.f32.mrb[0].mxu0
    %v1340 = vadd.f32 0.0, %v1339
    %v1341 = vpop.f32.mrb[0].mxu0
    %v1342 = vpop.f32.mrb[0].mxu0
    %v1343 = vpop.f32.mrb[0].mxu0
    %1344 = vdwg.mxu0
    %1349 = vrot.lane.b32.xlu0 %v961, 16
    %v1350 = vpop.permute.xlu0 %1349
    %1351 = vrot.lane.b32.xlu0 %v1088, 16
    %v1352 = vpop.permute.xlu0 %1351
    %1353 = vrot.lane.b32.xlu0 %v1214, 16
    %v1354 = vpop.permute.xlu0 %1353
    %1355 = vrot.lane.b32.xlu0 %v1340, 16
    %v1356 = vpop.permute.xlu0 %1355
    %v1361 = vsel %vm395, %v462, %v1350
    %v1362 = vsel %vm395, %v589, %v1352
    %v1363 = vsel %vm395, %v711, %v1354
    %v1364 = vsel %vm395, %v837, %v1356
    %v1365 = vld [vmem:[%s9] sm:$0xff]
    %v1366 = vld [vmem:[%s9 + $0x8] sm:$0xff]
    %v1367 = vld [vmem:[%s9 + $0x10] sm:$0xff]
    %v1368 = vld [vmem:[%s9 + $0x18] sm:$0xff]
    %v1369 = vpack.c.bf16 %v1366, %v1365
    %v1370 = vpack.c.bf16 %v1368, %v1367
    %v1371 = vpack.c.bf16 %v1362, %v1361
    %v1372 = vpack.c.bf16 %v1364, %v1363
    %v1373 = vld [vmem:[%s10] sm:$0xff]
    %v1374 = vld [vmem:[%s10 + $0x8] sm:$0xff]
    %v1375 = vld [vmem:[%s10 + $0x10] sm:$0xff]
    %v1376 = vld [vmem:[%s10 + $0x18] sm:$0xff]
    %1378 = vset.pattern.permute.xlu0 0
    %1379 = vperm.xlu0 %1378, %v1373
    %v1380 = vpop.permute.xlu0 %1379
    %1383 = vset.pattern.permute.xlu0 0
    %1384 = vperm.xlu0 %1383, %v1374
    %v1385 = vpop.permute.xlu0 %1384
    %1388 = vset.pattern.permute.xlu0 0
    %1389 = vperm.xlu0 %1388, %v1375
    %v1390 = vpop.permute.xlu0 %1389
    %1393 = vset.pattern.permute.xlu0 0
    %1394 = vperm.xlu0 %1393, %v1376
    %v1395 = vpop.permute.xlu0 %1394
    %v1398 = vsel %vm129, %v1369, 0
    %v1401 = vsel %vm129, %v1370, 0
    %1403 = vmatprep.subr.bf16.mxu0 0
    %1404 = vmatpush1.bf16.msra.mxu0 %v1371
    %1405 = vmatprep.subr.bf16.mxu0 0
    %1406 = vmatpush1.bf16.msra.mxu0 %v1372
    %1407 = vmatprep.subr.bf16.mxu0 0
    %1408 = vmatpush1.bf16.msra.mxu0 0
    %1409 = vmatprep.subr.bf16.mxu0 0
    %1410 = vmatpush1.bf16.msra.mxu0 0
    %1411 = vmatprep.subr.bf16.mxu0 0
    %1412 = vmatpush1.bf16.msra.mxu0 0
    %1413 = vmatprep.subr.bf16.mxu0 0
    %1414 = vmatpush1.bf16.msra.mxu0 0
    %1415 = vmatprep.subr.bf16.mxu0 0
    %1416 = vmatpush1.bf16.msra.mxu0 0
    %1417 = vmatprep.subr.bf16.mxu0 0
    %1418 = vmatpush1.bf16.msra.mxu0 0
    %1419 = vmatprep.subr.bf16.mxu0 0
    %1420 = vmatpush1.bf16.msra.mxu0 0
    %1421 = vmatprep.subr.bf16.mxu0 0
    %1422 = vmatpush1.bf16.msra.mxu0 0
    %1423 = vmatprep.subr.bf16.mxu0 0
    %1424 = vmatpush1.bf16.msra.mxu0 0
    %1425 = vmatprep.subr.bf16.mxu0 0
    %1426 = vmatpush1.bf16.msra.mxu0 0
    %1427 = vmatprep.subr.bf16.mxu0 0
    %1428 = vmatpush1.bf16.msra.mxu0 0
    %1429 = vmatprep.subr.bf16.mxu0 0
    %1430 = vmatpush1.bf16.msra.mxu0 0
    %1431 = vmatprep.subr.bf16.mxu0 0
    %1432 = vmatpush1.bf16.msra.mxu0 0
    %1433 = vmatprep.subr.bf16.mxu0 0
    %1434 = vmatpush1.bf16.msra.mxu0 0
    %1435 = vmatprep.mubr.bf16.mxu0 0
    %1436 = vmatmul.mubr.bf16.gmra.mrb[0].mxu0 %v1398
    %v1437 = vpop.f32.mrb[0].mxu0
    %v1438 = vadd.f32 %v1380, %v1437
    %v1439 = vpop.f32.mrb[0].mxu0
    %v1440 = vpop.f32.mrb[0].mxu0
    %v1441 = vadd.f32 %v1385, %v1440
    %v1442 = vpop.f32.mrb[0].mxu0
    %1443 = vmatprep.mubr.bf16.mxu0 0
    %1444 = vmatmul.mubr.bf16.gmra.mrb[0].mxu0 %v1401
    %v1445 = vpop.f32.mrb[0].mxu0
    %v1446 = vadd.f32 %v1390, %v1445
    %v1447 = vpop.f32.mrb[0].mxu0
    %v1448 = vpop.f32.mrb[0].mxu0
    %v1449 = vadd.f32 %v1395, %v1448
    %v1450 = vpop.f32.mrb[0].mxu0
    %1451 = vdwg.mxu0
    %1452 = vst.msk [vmem:[#allocation8] sm:$0xff] %vm129, %v1438
    %1453 = vst.msk [vmem:[#allocation8 + $0x8] sm:$0xff] %vm129, %v1441
    %1454 = vst.msk [vmem:[#allocation8 + $0x10] sm:$0xff] %vm129, %v1446
    %1455 = vst.msk [vmem:[#allocation8 + $0x18] sm:$0xff] %vm129, %v1449
    // Predicated region
    $region58: #{tpu_custom_call.1} parent=1 // pred_check
      _
    $region59: #{tpu_custom_call.1} parent=1 // pred_check_branch
      %1457 = sbr.rel (0) target = $region61
    $region60: #{tpu_custom_call.1} parent=1 // pred_region
      %s1459 = ssub.s32 512, 512
      %1460 = vsyncadd [#allocation4], %s1459
      %s1461 = sshll.u32 [#allocation8], 4
      %s1462 = int_to_ptr.vmem [resolvable:$true] %s1461
      %1467 = dma.vmem_to_hbm [thread:$0]  %s1462, 512, %s11, [#allocation4], 128, 128, 8
    $region61: #{tpu_custom_call.1} parent=1 // pred_fallthru
      _
    // Predicated region
    $region62: #{tpu_custom_call.1} parent=1 // pred_check
      _
    $region63: #{tpu_custom_call.1} parent=1 // pred_check_branch
      %1469 = sbr.rel (0) target = $region65
    $region64: #{tpu_custom_call.1} parent=1 // pred_region
      %1470 = dma.done [#allocation4], 512
    $region65: #{tpu_custom_call.1} parent=1 // pred_fallthru
      _
    %1471 = vsyncpa [#allocation3], 1
    %1472 = vsyncpa [#allocation6], 1
    %1473 = vsyncpa [#allocation4], 1

</llo_original>
